<compile_context>
chip_gen: v7x
topology: tpu7x:2x2x1
jax: 0.10.0
libtpu: 0.0.40
codegen_flags: <defaults>
</compile_context>

<pallas_src>
import functools
import math

import jax
import jax.numpy as jnp
from jax.experimental import pallas as pl
from jax.experimental.pallas import tpu as pltpu


def _round_up(x, m):
    return ((x + m - 1) // m) * m


def _spike_gru4rec_kernel(maxlen_ref,                       # SMEM scalar prefetch
                          emb_ref, gamma_ref, beta_ref,
                          wx_ref, wrzh_ref, wnh_ref, wd_ref, bd_ref, lens_ref,
                          out_ref, xpre_ref,
                          *, T, tau, v_th, eps, D, Dpad, CH, U, TB):
    # Hoisted grid-invariant loads (never re-issued inside the loops).
    gamma = gamma_ref[...]                                  # (1, D) f32
    beta = beta_ref[...]                                    # (1, D) f32
    wx = wx_ref[...]                                        # (D, 3*Dpad) f32
    wrzh = wrzh_ref[...]                                    # (Dpad, 2*Dpad) bf16
    wnh = wnh_ref[...]                                      # (Dpad, Dpad)  bf16

    max_len = maxlen_ref[pl.program_id(0)]                  # tile's max seq len
    inv_tau = 1.0 / tau
    inv_T = 1.0 / T

    # ---- Pre-pass over time, CH steps per chunk, bounded by max_len. ----
    # LayerNorm is identical for all T repeated copies of the input, so it is
    # computed once; the T-step LIF (soft reset, decay_input, v_th=1) is run
    # per element and the spikes averaged; then ONE MXU matmul per chunk
    # against the fused, per-gate lane-padded [wrx|wzx|wnx] weight.
    n_chunks = pl.cdiv(max_len, CH)

    def prepass(c, carry):
        t0 = pl.multiple_of(c * CH, CH)
        x = emb_ref[pl.ds(t0, CH)].astype(jnp.float32)       # (CH, TB, D)
        mu = jnp.mean(x, axis=-1, keepdims=True)
        xc = x - mu
        var = jnp.mean(xc * xc, axis=-1, keepdims=True)
        x_ln = xc * jax.lax.rsqrt(var + eps) * gamma + beta
        v = jnp.zeros_like(x_ln)
        s_sum = jnp.zeros_like(x_ln)
        for _ in range(T):                                   # T small & static; VPU only
            v = v + (x_ln - v) * inv_tau                     # neuronal charge
            s = (v >= v_th).astype(jnp.float32)              # heaviside (ATan fwd)
            v = v - s * v_th                                 # soft reset (v_reset=None)
            s_sum = s_sum + s
        snn = s_sum * inv_T                                  # spike-rate input to SGRU
        xp = jnp.dot(snn.reshape(CH * TB, D), wx,
                     preferred_element_type=jnp.float32)     # (CH*TB, 3*Dpad)
        r0 = pl.multiple_of(c * (CH * TB), CH * TB)
        xpre_ref[pl.ds(r0, CH * TB)] = xp
        return carry

    jax.lax.fori_loop(0, n_chunks, prepass, 0)

    # ---- Spiking GRU recurrence (the only serial part). ----
    # Dynamic trip count = round_up(max_len, U); padded/extra steps never win
    # the select below (tgt <= max_len-1), and padded h columns stay 0.
    tgt = lens_ref[...] - 1                                  # (TB, 1) int32

    def step_chunk(c, carry):
        h, sel_h = carry                                     # (TB, Dpad) f32, h in {0,1}
        for u in range(U):                                   # manual unroll for ILP
            i = c * U + u
            r0 = pl.multiple_of(i * TB, TB)
            xp = xpre_ref[pl.ds(r0, TB)]                     # (TB, 3*Dpad) f32
            hz = jnp.dot(h.astype(jnp.bfloat16), wrzh,
                         preferred_element_type=jnp.float32)  # (TB, 2*Dpad)
            rt = xp[:, 0:Dpad] + hz[:, 0:Dpad]               # lane-aligned slices
            zt = xp[:, Dpad:2 * Dpad] + hz[:, Dpad:2 * Dpad]
            r = (rt >= 0.0).astype(jnp.float32)              # Erf surrogate fwd
            z = (zt >= 0.0).astype(jnp.float32)
            nt = xp[:, 2 * Dpad:3 * Dpad] + jnp.dot(
                (r * h).astype(jnp.bfloat16), wnh,
                preferred_element_type=jnp.float32)
            n = (nt >= 0.0).astype(jnp.float32)              # ATan surrogate fwd
            h = z * h + (1.0 - z) * n                        # new hidden state in {0,1}
            sel_h = jnp.where(tgt == i, h, sel_h)            # gather_indexes(len-1)
        return h, sel_h

    h0 = jnp.zeros((TB, Dpad), jnp.float32)
    n_steps = pl.cdiv(max_len, U)
    _, sel_h = jax.lax.fori_loop(0, n_steps, step_chunk, (h0, h0))

    # ---- Hoisted dense head (linear per row => exact), f32 for fidelity. ----
    out = jnp.dot(sel_h, wd_ref[...], preferred_element_type=jnp.float32)
    out_ref[...] = out + bd_ref[...]


def spike_gru4rec_forward(item_seq, item_seq_len, params,
                          *, vmem_target_bytes=40 << 20):
    emb_table = params["item_embedding"]                     # (n_items, D)
    B, L = item_seq.shape
    D = emb_table.shape[1]
    T = int(params["T"])
    tau = float(params["tau"])

    Dpad = _round_up(D, 128)          # per-gate lane-aligned block width
    U = 2                             # recurrence unroll (must divide CH)
    CH = 8 if L <= 64 else 16         # pre-pass time-chunk
    L_pad = _round_up(L, CH)

    def vmem_est(tb):                 # rough per-tile VMEM budget
        emb = 2 * L_pad * tb * D * 2                      # double-buffered bf16 block
        xpre = L_pad * tb * 3 * Dpad * 4                  # f32 scratch
        wts = 2 * (D * 3 * Dpad * 4 + Dpad * 2 * Dpad * 2
                   + Dpad * Dpad * 2 + Dpad * D * 4)
        outb = 2 * tb * D * 4
        tmp = CH * tb * D * 4 * 8 + CH * tb * 3 * Dpad * 4  # pre-pass transients
        return emb + xpre + wts + outb + tmp

    # >= 2 batch tiles (megacore sharding + DMA overlap), derived from budget.
    want = max(8, _round_up(-(-B // 2), 8))
    TB = 8
    for cand in (256, 128, 64, 32, 16, 8):
        if cand <= want and vmem_est(cand) <= vmem_target_bytes:
            TB = cand
            break
    B_pad = max(_round_up(B, TB), 2 * TB)
    n_tiles = B_pad // TB

    # --- Glue: embedding gather, time-major bf16 layout, weight fusion. ---
    # TODO(synk): fuse this gather into the kernel (scalar-prefetch item_seq +
    # manual row DMA from the HBM table) to avoid the (L,B,D) HBM round trip.
    emb = jnp.take(emb_table, item_seq, axis=0)              # (B, L, D)
    emb = jnp.transpose(emb, (1, 0, 2)).astype(jnp.bfloat16)  # (L, B, D) bf16
    emb = jnp.pad(emb, ((0, L_pad - L), (0, B_pad - B), (0, 0)))

    gamma = params["ln_gamma"].reshape(1, D).astype(jnp.float32)
    beta = params["ln_beta"].reshape(1, D).astype(jnp.float32)

    # PyTorch Linear weights are (out, in) acting on cat(x, h); split, transpose
    # to (in, out), and pad each gate block to Dpad columns / rows so every
    # slice in the kernel is lane-aligned (padded weights are zero => padded
    # hidden-state columns stay exactly 0).
    W_r, W_z, W_n = params["W_r"], params["W_z"], params["W_n"]   # (D, 2D)

    def xw(w):                       # input-side (D, Dpad)
        return jnp.pad(w[:, :D].T, ((0, 0), (0, Dpad - D)))

    def hw(w):                       # hidden-side (Dpad, Dpad)
        return jnp.pad(w[:, D:].T, ((0, Dpad - D), (0, Dpad - D)))

    wx = jnp.concatenate([xw(W_r), xw(W_z), xw(W_n)], axis=1).astype(jnp.float32)
    wrzh = jnp.concatenate([hw(W_r), hw(W_z)], axis=1).astype(jnp.bfloat16)
    wnh = hw(W_n).astype(jnp.bfloat16)
    wd = jnp.pad(params["W_dense"].T, ((0, Dpad - D), (0, 0))).astype(jnp.float32)
    bd = params["b_dense"].reshape(1, D).astype(jnp.float32)

    lens = jnp.clip(item_seq_len.astype(jnp.int32).reshape(B), 1, L)
    lens = jnp.pad(lens, (0, B_pad - B), constant_values=1)
    tile_max = jnp.max(lens.reshape(n_tiles, TB), axis=1).astype(jnp.int32)
    lens2d = lens.reshape(B_pad, 1)

    kernel = functools.partial(_spike_gru4rec_kernel, T=T, tau=tau, v_th=1.0,
                               eps=1e-5, D=D, Dpad=Dpad, CH=CH, U=U, TB=TB)

    def const(shape):
        return pl.BlockSpec(shape, lambda b, ml: (0,) * len(shape))

    vmem_limit = int(min(64 << 20, max(vmem_est(TB) * 5 // 4, 32 << 20)))

    out = pl.pallas_call(
        kernel,
        out_shape=jax.ShapeDtypeStruct((B_pad, D), jnp.float32),
        grid_spec=pltpu.PrefetchScalarGridSpec(
            num_scalar_prefetch=1,                           # per-tile max_len -> SMEM
            grid=(n_tiles,),
            in_specs=[
                pl.BlockSpec((L_pad, TB, D), lambda b, ml: (0, b, 0)),  # embeddings
                const((1, D)), const((1, D)),                # LN gamma/beta
                const((D, 3 * Dpad)),                        # fused [wrx|wzx|wnx]
                const((Dpad, 2 * Dpad)),                     # fused [wrh|wzh]
                const((Dpad, Dpad)),                         # wnh
                const((Dpad, D)), const((1, D)),             # dense W, b
                pl.BlockSpec((TB, 1), lambda b, ml: (b, 0)),  # item_seq_len
            ],
            out_specs=pl.BlockSpec((TB, D), lambda b, ml: (b, 0)),
            scratch_shapes=[pltpu.VMEM((L_pad * TB, 3 * Dpad), jnp.float32)],
        ),
        compiler_params=pltpu.CompilerParams(
            dimension_semantics=("parallel",),               # megacore sharding on v7x
            vmem_limit_bytes=vmem_limit),
    )(tile_max, emb, gamma, beta, wx, wrzh, wnh, wd, bd, lens2d)
    return out[:B]


if __name__ == "__main__":
    key = jax.random.PRNGKey(0)
    item_num = 50
    D = 32            # item_embedding_dim == hidden_size
    B, L, T = 2, 8, 4
    tau = 2.0
    n_items = item_num + 1

    k_emb, k_r, k_z, k_n, k_wd, k_bd, k_seq = jax.random.split(key, 7)
    stdv = 1.0 / math.sqrt(D)

    emb_table = jax.random.normal(k_emb, (n_items, D), jnp.float32)
    emb_table = emb_table.at[0].set(0.0)               # padding_idx = 0

    params = dict(
        item_embedding=emb_table,
        ln_gamma=jnp.ones((D,), jnp.float32),           # nn.LayerNorm defaults
        ln_beta=jnp.zeros((D,), jnp.float32),
        W_r=jax.random.uniform(k_r, (D, 2 * D), jnp.float32, -stdv, stdv),
        W_z=jax.random.uniform(k_z, (D, 2 * D), jnp.float32, -stdv, stdv),
        W_n=jax.random.uniform(k_n, (D, 2 * D), jnp.float32, -stdv, stdv),
        W_dense=jax.random.uniform(k_wd, (D, D), jnp.float32, -stdv, stdv),
        b_dense=jax.random.uniform(k_bd, (D,), jnp.float32, -stdv, stdv),
        T=T, tau=tau,
    )

    item_seq = jax.random.randint(k_seq, (B, L), 1, n_items, dtype=jnp.int32)
    item_seq_len = jnp.array([5, L], dtype=jnp.int32)   # right-padded, lens >= 1

    out = spike_gru4rec_forward(item_seq, item_seq_len, params)
    out = jax.block_until_ready(out)
    assert out.shape == (B, D)
    assert bool(jnp.all(jnp.isfinite(out)))
    print("KERNEL_OK")
</pallas_src>

<mosaic_0001>
module attributes {stable_mosaic.version = 11 : i64} {
  func.func @_spike_gru4rec_kernel(%arg0: i32, %arg1: memref<2xi32, #tpu.memory_space<smem>>, %arg2: memref<8x8x32xbf16, #tpu.memory_space<vmem>>, %arg3: memref<1x32xf32, #tpu.memory_space<vmem>>, %arg4: memref<1x32xf32, #tpu.memory_space<vmem>>, %arg5: memref<32x384xf32, #tpu.memory_space<vmem>>, %arg6: memref<128x256xbf16, #tpu.memory_space<vmem>>, %arg7: memref<128x128xbf16, #tpu.memory_space<vmem>>, %arg8: memref<128x32xf32, #tpu.memory_space<vmem>>, %arg9: memref<1x32xf32, #tpu.memory_space<vmem>>, %arg10: memref<8x1xi32, #tpu.memory_space<vmem>>, %arg11: memref<8x32xf32, #tpu.memory_space<vmem>>, %arg12: memref<64x384xf32, #tpu.memory_space<vmem>>) attributes {dimension_semantics = [#tpu.dimension_semantics<parallel>], iteration_bounds = array<i64: 2>, scalar_prefetch = 1 : i64, scratch_operands = 1 : i64, tpu.core_type = #tpu.core_type<tc>, window_params = [{transform_indices = @transform_0, window_bounds = array<i64: 8, 8, 32>}, {pipeline_mode = #tpu.pipeline_mode<synchronous>, transform_indices = @transform_1, window_bounds = array<i64: 1, 32>}, {pipeline_mode = #tpu.pipeline_mode<synchronous>, transform_indices = @transform_2, window_bounds = array<i64: 1, 32>}, {pipeline_mode = #tpu.pipeline_mode<synchronous>, transform_indices = @transform_3, window_bounds = array<i64: 32, 384>}, {pipeline_mode = #tpu.pipeline_mode<synchronous>, transform_indices = @transform_4, window_bounds = array<i64: 128, 256>}, {pipeline_mode = #tpu.pipeline_mode<synchronous>, transform_indices = @transform_5, window_bounds = array<i64: 128, 128>}, {pipeline_mode = #tpu.pipeline_mode<synchronous>, transform_indices = @transform_6, window_bounds = array<i64: 128, 32>}, {pipeline_mode = #tpu.pipeline_mode<synchronous>, transform_indices = @transform_7, window_bounds = array<i64: 1, 32>}, {transform_indices = @transform_8, window_bounds = array<i64: 8, 1>}, {transform_indices = @transform_9, window_bounds = array<i64: 8, 32>}]} {
    %c0 = arith.constant 0 : index
    %c0_0 = arith.constant 0 : index
    %0 = vector.load %arg3[%c0, %c0_0] : memref<1x32xf32, #tpu.memory_space<vmem>>, vector<1x32xf32>
    %c0_1 = arith.constant 0 : index
    %c0_2 = arith.constant 0 : index
    %1 = vector.load %arg4[%c0_1, %c0_2] : memref<1x32xf32, #tpu.memory_space<vmem>>, vector<1x32xf32>
    %c0_3 = arith.constant 0 : index
    %c0_4 = arith.constant 0 : index
    %2 = vector.load %arg5[%c0_3, %c0_4] : memref<32x384xf32, #tpu.memory_space<vmem>>, vector<32x384xf32>
    %c0_5 = arith.constant 0 : index
    %c0_6 = arith.constant 0 : index
    %3 = vector.load %arg6[%c0_5, %c0_6] : memref<128x256xbf16, #tpu.memory_space<vmem>>, vector<128x256xbf16>
    %c0_7 = arith.constant 0 : index
    %c0_8 = arith.constant 0 : index
    %4 = vector.load %arg7[%c0_7, %c0_8] : memref<128x128xbf16, #tpu.memory_space<vmem>>, vector<128x128xbf16>
    %5 = arith.index_cast %arg0 : i32 to index
    %6 = memref.load %arg1[%5] : memref<2xi32, #tpu.memory_space<smem>>
    %c7_i32 = arith.constant 7 : i32
    %7 = arith.addi %6, %c7_i32 : i32
    %c8_i32 = arith.constant 8 : i32
    %8 = arith.divsi %7, %c8_i32 : i32
    %c0_i32 = arith.constant 0 : i32
    %c0_i32_9 = arith.constant 0 : i32
    %9 = arith.subi %8, %c0_i32_9 : i32
    %10 = arith.addi %c0_i32_9, %9 : i32
    %c1_i32 = arith.constant 1 : i32
    scf.for %arg13 = %c0_i32_9 to %10 step %c1_i32  : i32 {
      %c8_i32_23 = arith.constant 8 : i32
      %26 = arith.muli %arg13, %c8_i32_23 : i32
      %27 = tpu.assume_multiple %26, 8 : i32
      %28 = arith.index_cast %27 : i32 to index
      %c0_24 = arith.constant 0 : index
      %c0_25 = arith.constant 0 : index
      %29 = vector.load %arg2[%28, %c0_24, %c0_25] : memref<8x8x32xbf16, #tpu.memory_space<vmem>>, vector<8x8x32xbf16>
      %30 = arith.extf %29 : vector<8x8x32xbf16> to vector<8x8x32xf32>
      %cst_26 = arith.constant dense<0.000000e+00> : vector<8x8xf32>
      %31 = vector.multi_reduction <add>, %30, %cst_26 [2] : vector<8x8x32xf32> to vector<8x8xf32>
      %32 = vector.shape_cast %31 : vector<8x8xf32> to vector<8x8x1xf32>
      %cst_27 = arith.constant 3.200000e+01 : f32
      %33 = vector.broadcast %cst_27 : f32 to vector<8x8x1xf32>
      %34 = arith.divf %32, %33 : vector<8x8x1xf32>
      %35 = vector.broadcast %34 : vector<8x8x1xf32> to vector<8x8x32xf32>
      %36 = arith.subf %30, %35 : vector<8x8x32xf32>
      %37 = arith.mulf %36, %36 : vector<8x8x32xf32>
      %cst_28 = arith.constant dense<0.000000e+00> : vector<8x8xf32>
      %38 = vector.multi_reduction <add>, %37, %cst_28 [2] : vector<8x8x32xf32> to vector<8x8xf32>
      %39 = vector.shape_cast %38 : vector<8x8xf32> to vector<8x8x1xf32>
      %cst_29 = arith.constant 3.200000e+01 : f32
      %40 = vector.broadcast %cst_29 : f32 to vector<8x8x1xf32>
      %41 = arith.divf %39, %40 : vector<8x8x1xf32>
      %cst_30 = arith.constant 9.99999974E-6 : f32
      %42 = vector.broadcast %cst_30 : f32 to vector<8x8x1xf32>
      %43 = arith.addf %41, %42 : vector<8x8x1xf32>
      %44 = math.rsqrt %43 : vector<8x8x1xf32>
      %45 = vector.broadcast %44 : vector<8x8x1xf32> to vector<8x8x32xf32>
      %46 = arith.mulf %36, %45 : vector<8x8x32xf32>
      %47 = vector.shape_cast %0 : vector<1x32xf32> to vector<1x1x32xf32>
      %48 = vector.broadcast %47 : vector<1x1x32xf32> to vector<8x8x32xf32>
      %49 = arith.mulf %46, %48 : vector<8x8x32xf32>
      %50 = vector.shape_cast %1 : vector<1x32xf32> to vector<1x1x32xf32>
      %51 = vector.broadcast %50 : vector<1x1x32xf32> to vector<8x8x32xf32>
      %52 = arith.addf %49, %51 : vector<8x8x32xf32>
      %cst_31 = arith.constant 0.000000e+00 : f32
      %53 = vector.broadcast %cst_31 : f32 to vector<8x8x32xf32>
      %cst_32 = arith.constant 0.000000e+00 : f32
      %54 = vector.broadcast %cst_32 : f32 to vector<8x8x32xf32>
      %55 = arith.subf %52, %53 : vector<8x8x32xf32>
      %cst_33 = arith.constant 5.000000e-01 : f32
      %56 = vector.broadcast %cst_33 : f32 to vector<8x8x32xf32>
      %57 = arith.mulf %55, %56 : vector<8x8x32xf32>
      %58 = arith.addf %53, %57 : vector<8x8x32xf32>
      %cst_34 = arith.constant 1.000000e+00 : f32
      %59 = vector.broadcast %cst_34 : f32 to vector<8x8x32xf32>
      %60 = arith.cmpf oge, %58, %59 : vector<8x8x32xf32>
      %61 = arith.extui %60 : vector<8x8x32xi1> to vector<8x8x32xi32>
      %62 = arith.sitofp %61 : vector<8x8x32xi32> to vector<8x8x32xf32>
      %cst_35 = arith.constant 1.000000e+00 : f32
      %63 = vector.broadcast %cst_35 : f32 to vector<8x8x32xf32>
      %64 = arith.mulf %62, %63 : vector<8x8x32xf32>
      %65 = arith.subf %58, %64 : vector<8x8x32xf32>
      %66 = arith.addf %54, %62 : vector<8x8x32xf32>
      %67 = arith.subf %52, %65 : vector<8x8x32xf32>
      %cst_36 = arith.constant 5.000000e-01 : f32
      %68 = vector.broadcast %cst_36 : f32 to vector<8x8x32xf32>
      %69 = arith.mulf %67, %68 : vector<8x8x32xf32>
      %70 = arith.addf %65, %69 : vector<8x8x32xf32>
      %cst_37 = arith.constant 1.000000e+00 : f32
      %71 = vector.broadcast %cst_37 : f32 to vector<8x8x32xf32>
      %72 = arith.cmpf oge, %70, %71 : vector<8x8x32xf32>
      %73 = arith.extui %72 : vector<8x8x32xi1> to vector<8x8x32xi32>
      %74 = arith.sitofp %73 : vector<8x8x32xi32> to vector<8x8x32xf32>
      %cst_38 = arith.constant 1.000000e+00 : f32
      %75 = vector.broadcast %cst_38 : f32 to vector<8x8x32xf32>
      %76 = arith.mulf %74, %75 : vector<8x8x32xf32>
      %77 = arith.subf %70, %76 : vector<8x8x32xf32>
      %78 = arith.addf %66, %74 : vector<8x8x32xf32>
      %79 = arith.subf %52, %77 : vector<8x8x32xf32>
      %cst_39 = arith.constant 5.000000e-01 : f32
      %80 = vector.broadcast %cst_39 : f32 to vector<8x8x32xf32>
      %81 = arith.mulf %79, %80 : vector<8x8x32xf32>
      %82 = arith.addf %77, %81 : vector<8x8x32xf32>
      %cst_40 = arith.constant 1.000000e+00 : f32
      %83 = vector.broadcast %cst_40 : f32 to vector<8x8x32xf32>
      %84 = arith.cmpf oge, %82, %83 : vector<8x8x32xf32>
      %85 = arith.extui %84 : vector<8x8x32xi1> to vector<8x8x32xi32>
      %86 = arith.sitofp %85 : vector<8x8x32xi32> to vector<8x8x32xf32>
      %cst_41 = arith.constant 1.000000e+00 : f32
      %87 = vector.broadcast %cst_41 : f32 to vector<8x8x32xf32>
      %88 = arith.mulf %86, %87 : vector<8x8x32xf32>
      %89 = arith.subf %82, %88 : vector<8x8x32xf32>
      %90 = arith.addf %78, %86 : vector<8x8x32xf32>
      %91 = arith.subf %52, %89 : vector<8x8x32xf32>
      %cst_42 = arith.constant 5.000000e-01 : f32
      %92 = vector.broadcast %cst_42 : f32 to vector<8x8x32xf32>
      %93 = arith.mulf %91, %92 : vector<8x8x32xf32>
      %94 = arith.addf %89, %93 : vector<8x8x32xf32>
      %cst_43 = arith.constant 1.000000e+00 : f32
      %95 = vector.broadcast %cst_43 : f32 to vector<8x8x32xf32>
      %96 = arith.cmpf oge, %94, %95 : vector<8x8x32xf32>
      %97 = arith.extui %96 : vector<8x8x32xi1> to vector<8x8x32xi32>
      %98 = arith.sitofp %97 : vector<8x8x32xi32> to vector<8x8x32xf32>
      %cst_44 = arith.constant 1.000000e+00 : f32
      %99 = vector.broadcast %cst_44 : f32 to vector<8x8x32xf32>
      %100 = arith.mulf %98, %99 : vector<8x8x32xf32>
      %101 = arith.subf %94, %100 : vector<8x8x32xf32>
      %102 = arith.addf %90, %98 : vector<8x8x32xf32>
      %cst_45 = arith.constant 2.500000e-01 : f32
      %103 = vector.broadcast %cst_45 : f32 to vector<8x8x32xf32>
      %104 = arith.mulf %102, %103 : vector<8x8x32xf32>
      %105 = vector.shape_cast %104 : vector<8x8x32xf32> to vector<64x32xf32>
      %cst_46 = arith.constant dense<0.000000e+00> : vector<64x384xf32>
      %106 = tpu.matmul %105, %2, %cst_46 {dimension_numbers = #tpu.dot_dimension_numbers<[1], [0], [0], [1], [0, 0, 1, 1], [], []>} : vector<64x32xf32>, vector<32x384xf32>, vector<64x384xf32> -> vector<64x384xf32>
      %c64_i32 = arith.constant 64 : i32
      %107 = arith.muli %arg13, %c64_i32 : i32
      %108 = tpu.assume_multiple %107, 64 : i32
      %109 = arith.index_cast %108 : i32 to index
      %c0_47 = arith.constant 0 : index
      %110 = vector.load %arg12[%109, %c0_47] : memref<64x384xf32, #tpu.memory_space<vmem>>, vector<64x384xf32>
      tpu.vector_store %arg12[%109, %c0_47], %106 {strides = array<i32>} : memref<64x384xf32, #tpu.memory_space<vmem>>, vector<64x384xf32>,
    }
    %c0_10 = arith.constant 0 : index
    %c0_11 = arith.constant 0 : index
    %11 = vector.load %arg10[%c0_10, %c0_11] : memref<8x1xi32, #tpu.memory_space<vmem>>, vector<8x1xi32>
    %c1_i32_12 = arith.constant 1 : i32
    %12 = vector.broadcast %c1_i32_12 : i32 to vector<8x1xi32>
    %13 = arith.subi %11, %12 : vector<8x1xi32>
    %cst = arith.constant 0.000000e+00 : f32
    %14 = vector.broadcast %cst : f32 to vector<8x128xf32>
    %c1_i32_13 = arith.constant 1 : i32
    %15 = arith.addi %6, %c1_i32_13 : i32
    %c2_i32 = arith.constant 2 : i32
    %16 = arith.divsi %15, %c2_i32 : i32
    %c0_i32_14 = arith.constant 0 : i32
    %17 = arith.subi %16, %c0_i32_14 : i32
    %18 = arith.addi %c0_i32_14, %17 : i32
    %c1_i32_15 = arith.constant 1 : i32
    %19:2 = scf.for %arg13 = %c0_i32_14 to %18 step %c1_i32_15 iter_args(%arg14 = %14, %arg15 = %14) -> (vector<8x128xf32>, vector<8x128xf32>)  : i32 {
      %c2_i32_23 = arith.constant 2 : i32
      %26 = arith.muli %arg13, %c2_i32_23 : i32
      %c0_i32_24 = arith.constant 0 : i32
      %27 = arith.addi %26, %c0_i32_24 : i32
      %c8_i32_25 = arith.constant 8 : i32
      %28 = arith.muli %27, %c8_i32_25 : i32
      %29 = tpu.assume_multiple %28, 8 : i32
      %30 = arith.index_cast %29 : i32 to index
      %c0_26 = arith.constant 0 : index
      %31 = vector.load %arg12[%30, %c0_26] : memref<64x384xf32, #tpu.memory_space<vmem>>, vector<8x384xf32>
      %32 = arith.truncf %arg14 : vector<8x128xf32> to vector<8x128xbf16>
      %cst_27 = arith.constant dense<0.000000e+00> : vector<8x256xf32>
      %33 = tpu.matmul %32, %3, %cst_27 {dimension_numbers = #tpu.dot_dimension_numbers<[1], [0], [0], [1], [0, 0, 1, 1], [], []>} : vector<8x128xbf16>, vector<128x256xbf16>, vector<8x256xf32> -> vector<8x256xf32>
      %34 = vector.extract_strided_slice %31 {offsets = [0, 0], sizes = [8, 128], strides = [1, 1]} : vector<8x384xf32> to vector<8x128xf32>
      %35 = vector.extract_strided_slice %33 {offsets = [0, 0], sizes = [8, 128], strides = [1, 1]} : vector<8x256xf32> to vector<8x128xf32>
      %36 = arith.addf %34, %35 : vector<8x128xf32>
      %37 = vector.extract_strided_slice %31 {offsets = [0, 128], sizes = [8, 128], strides = [1, 1]} : vector<8x384xf32> to vector<8x128xf32>
      %38 = vector.extract_strided_slice %33 {offsets = [0, 128], sizes = [8, 128], strides = [1, 1]} : vector<8x256xf32> to vector<8x128xf32>
      %39 = arith.addf %37, %38 : vector<8x128xf32>
      %cst_28 = arith.constant 0.000000e+00 : f32
      %40 = vector.broadcast %cst_28 : f32 to vector<8x128xf32>
      %41 = arith.cmpf oge, %36, %40 : vector<8x128xf32>
      %42 = arith.extui %41 : vector<8x128xi1> to vector<8x128xi32>
      %43 = arith.sitofp %42 : vector<8x128xi32> to vector<8x128xf32>
      %cst_29 = arith.constant 0.000000e+00 : f32
      %44 = vector.broadcast %cst_29 : f32 to vector<8x128xf32>
      %45 = arith.cmpf oge, %39, %44 : vector<8x128xf32>
      %46 = arith.extui %45 : vector<8x128xi1> to vector<8x128xi32>
      %47 = arith.sitofp %46 : vector<8x128xi32> to vector<8x128xf32>
      %48 = vector.extract_strided_slice %31 {offsets = [0, 256], sizes = [8, 128], strides = [1, 1]} : vector<8x384xf32> to vector<8x128xf32>
      %49 = arith.mulf %43, %arg14 : vector<8x128xf32>
      %50 = arith.truncf %49 : vector<8x128xf32> to vector<8x128xbf16>
      %cst_30 = arith.constant dense<0.000000e+00> : vector<8x128xf32>
      %51 = tpu.matmul %50, %4, %cst_30 {dimension_numbers = #tpu.dot_dimension_numbers<[1], [0], [0], [1], [0, 0, 1, 1], [], []>} : vector<8x128xbf16>, vector<128x128xbf16>, vector<8x128xf32> -> vector<8x128xf32>
      %52 = arith.addf %48, %51 : vector<8x128xf32>
      %cst_31 = arith.constant 0.000000e+00 : f32
      %53 = vector.broadcast %cst_31 : f32 to vector<8x128xf32>
      %54 = arith.cmpf oge, %52, %53 : vector<8x128xf32>
      %55 = arith.extui %54 : vector<8x128xi1> to vector<8x128xi32>
      %56 = arith.sitofp %55 : vector<8x128xi32> to vector<8x128xf32>
      %57 = arith.mulf %47, %arg14 : vector<8x128xf32>
      %cst_32 = arith.constant 1.000000e+00 : f32
      %58 = vector.broadcast %cst_32 : f32 to vector<8x128xf32>
      %59 = arith.subf %58, %47 : vector<8x128xf32>
      %60 = arith.mulf %59, %56 : vector<8x128xf32>
      %61 = arith.addf %57, %60 : vector<8x128xf32>
      %62 = vector.broadcast %27 : i32 to vector<8x1xi32>
      %63 = arith.cmpi eq, %13, %62 : vector<8x1xi32>
      %64 = vector.shape_cast %63 : vector<8x1xi1> to vector<8x1xi1>
      %65 = vector.broadcast %64 : vector<8x1xi1> to vector<8x128xi1>
      %66 = arith.select %65, %61, %arg15 : vector<8x128xi1>, vector<8x128xf32>
      %c2_i32_33 = arith.constant 2 : i32
      %67 = arith.muli %arg13, %c2_i32_33 : i32
      %c1_i32_34 = arith.constant 1 : i32
      %68 = arith.addi %67, %c1_i32_34 : i32
      %c8_i32_35 = arith.constant 8 : i32
      %69 = arith.muli %68, %c8_i32_35 : i32
      %70 = tpu.assume_multiple %69, 8 : i32
      %71 = arith.index_cast %70 : i32 to index
      %c0_36 = arith.constant 0 : index
      %72 = vector.load %arg12[%71, %c0_36] : memref<64x384xf32, #tpu.memory_space<vmem>>, vector<8x384xf32>
      %73 = arith.truncf %61 : vector<8x128xf32> to vector<8x128xbf16>
      %cst_37 = arith.constant dense<0.000000e+00> : vector<8x256xf32>
      %74 = tpu.matmul %73, %3, %cst_37 {dimension_numbers = #tpu.dot_dimension_numbers<[1], [0], [0], [1], [0, 0, 1, 1], [], []>} : vector<8x128xbf16>, vector<128x256xbf16>, vector<8x256xf32> -> vector<8x256xf32>
      %75 = vector.extract_strided_slice %72 {offsets = [0, 0], sizes = [8, 128], strides = [1, 1]} : vector<8x384xf32> to vector<8x128xf32>
      %76 = vector.extract_strided_slice %74 {offsets = [0, 0], sizes = [8, 128], strides = [1, 1]} : vector<8x256xf32> to vector<8x128xf32>
      %77 = arith.addf %75, %76 : vector<8x128xf32>
      %78 = vector.extract_strided_slice %72 {offsets = [0, 128], sizes = [8, 128], strides = [1, 1]} : vector<8x384xf32> to vector<8x128xf32>
      %79 = vector.extract_strided_slice %74 {offsets = [0, 128], sizes = [8, 128], strides = [1, 1]} : vector<8x256xf32> to vector<8x128xf32>
      %80 = arith.addf %78, %79 : vector<8x128xf32>
      %cst_38 = arith.constant 0.000000e+00 : f32
      %81 = vector.broadcast %cst_38 : f32 to vector<8x128xf32>
      %82 = arith.cmpf oge, %77, %81 : vector<8x128xf32>
      %83 = arith.extui %82 : vector<8x128xi1> to vector<8x128xi32>
      %84 = arith.sitofp %83 : vector<8x128xi32> to vector<8x128xf32>
      %cst_39 = arith.constant 0.000000e+00 : f32
      %85 = vector.broadcast %cst_39 : f32 to vector<8x128xf32>
      %86 = arith.cmpf oge, %80, %85 : vector<8x128xf32>
      %87 = arith.extui %86 : vector<8x128xi1> to vector<8x128xi32>
      %88 = arith.sitofp %87 : vector<8x128xi32> to vector<8x128xf32>
      %89 = vector.extract_strided_slice %72 {offsets = [0, 256], sizes = [8, 128], strides = [1, 1]} : vector<8x384xf32> to vector<8x128xf32>
      %90 = arith.mulf %84, %61 : vector<8x128xf32>
      %91 = arith.truncf %90 : vector<8x128xf32> to vector<8x128xbf16>
      %cst_40 = arith.constant dense<0.000000e+00> : vector<8x128xf32>
      %92 = tpu.matmul %91, %4, %cst_40 {dimension_numbers = #tpu.dot_dimension_numbers<[1], [0], [0], [1], [0, 0, 1, 1], [], []>} : vector<8x128xbf16>, vector<128x128xbf16>, vector<8x128xf32> -> vector<8x128xf32>
      %93 = arith.addf %89, %92 : vector<8x128xf32>
      %cst_41 = arith.constant 0.000000e+00 : f32
      %94 = vector.broadcast %cst_41 : f32 to vector<8x128xf32>
      %95 = arith.cmpf oge, %93, %94 : vector<8x128xf32>
      %96 = arith.extui %95 : vector<8x128xi1> to vector<8x128xi32>
      %97 = arith.sitofp %96 : vector<8x128xi32> to vector<8x128xf32>
      %98 = arith.mulf %88, %61 : vector<8x128xf32>
      %cst_42 = arith.constant 1.000000e+00 : f32
      %99 = vector.broadcast %cst_42 : f32 to vector<8x128xf32>
      %100 = arith.subf %99, %88 : vector<8x128xf32>
      %101 = arith.mulf %100, %97 : vector<8x128xf32>
      %102 = arith.addf %98, %101 : vector<8x128xf32>
      %103 = vector.broadcast %68 : i32 to vector<8x1xi32>
      %104 = arith.cmpi eq, %13, %103 : vector<8x1xi32>
      %105 = vector.shape_cast %104 : vector<8x1xi1> to vector<8x1xi1>
      %106 = vector.broadcast %105 : vector<8x1xi1> to vector<8x128xi1>
      %107 = arith.select %106, %102, %66 : vector<8x128xi1>, vector<8x128xf32>
      scf.yield %102, %107 : vector<8x128xf32>, vector<8x128xf32>
    }
    %c0_16 = arith.constant 0 : index
    %c0_17 = arith.constant 0 : index
    %20 = vector.load %arg8[%c0_16, %c0_17] : memref<128x32xf32, #tpu.memory_space<vmem>>, vector<128x32xf32>
    %cst_18 = arith.constant dense<0.000000e+00> : vector<8x32xf32>
    %21 = tpu.matmul %19#1, %20, %cst_18 {dimension_numbers = #tpu.dot_dimension_numbers<[1], [0], [0], [1], [0, 0, 1, 1], [], []>} : vector<8x128xf32>, vector<128x32xf32>, vector<8x32xf32> -> vector<8x32xf32>
    %c0_19 = arith.constant 0 : index
    %c0_20 = arith.constant 0 : index
    %22 = vector.load %arg9[%c0_19, %c0_20] : memref<1x32xf32, #tpu.memory_space<vmem>>, vector<1x32xf32>
    %23 = vector.broadcast %22 : vector<1x32xf32> to vector<8x32xf32>
    %24 = arith.addf %21, %23 : vector<8x32xf32>
    %c0_21 = arith.constant 0 : index
    %c0_22 = arith.constant 0 : index
    %25 = vector.load %arg11[%c0_21, %c0_22] : memref<8x32xf32, #tpu.memory_space<vmem>>, vector<8x32xf32>
    tpu.vector_store %arg11[%c0_21, %c0_22], %24 {strides = array<i32>} : memref<8x32xf32, #tpu.memory_space<vmem>>, vector<8x32xf32>,
    return
  }
  func.func @transform_0(%arg0: i32, %arg1: memref<2xi32, #tpu.memory_space<smem>>) -> (i32, i32, i32) {
    %c0_i32 = arith.constant 0 : i32
    %c0_i32_0 = arith.constant 0 : i32
    %c0_i32_1 = arith.constant 0 : i32
    return %c0_i32, %arg0, %c0_i32_0 : i32, i32, i32
  }
  func.func @transform_1(%arg0: i32, %arg1: memref<2xi32, #tpu.memory_space<smem>>) -> (i32, i32) {
    %c0_i32 = arith.constant 0 : i32
    %c0_i32_0 = arith.constant 0 : i32
    %c0_i32_1 = arith.constant 0 : i32
    return %c0_i32, %c0_i32_0 : i32, i32
  }
  func.func @transform_2(%arg0: i32, %arg1: memref<2xi32, #tpu.memory_space<smem>>) -> (i32, i32) {
    %c0_i32 = arith.constant 0 : i32
    %c0_i32_0 = arith.constant 0 : i32
    %c0_i32_1 = arith.constant 0 : i32
    return %c0_i32, %c0_i32_0 : i32, i32
  }
  func.func @transform_3(%arg0: i32, %arg1: memref<2xi32, #tpu.memory_space<smem>>) -> (i32, i32) {
    %c0_i32 = arith.constant 0 : i32
    %c0_i32_0 = arith.constant 0 : i32
    %c0_i32_1 = arith.constant 0 : i32
    return %c0_i32, %c0_i32_0 : i32, i32
  }
  func.func @transform_4(%arg0: i32, %arg1: memref<2xi32, #tpu.memory_space<smem>>) -> (i32, i32) {
    %c0_i32 = arith.constant 0 : i32
    %c0_i32_0 = arith.constant 0 : i32
    %c0_i32_1 = arith.constant 0 : i32
    return %c0_i32, %c0_i32_0 : i32, i32
  }
  func.func @transform_5(%arg0: i32, %arg1: memref<2xi32, #tpu.memory_space<smem>>) -> (i32, i32) {
    %c0_i32 = arith.constant 0 : i32
    %c0_i32_0 = arith.constant 0 : i32
    %c0_i32_1 = arith.constant 0 : i32
    return %c0_i32, %c0_i32_0 : i32, i32
  }
  func.func @transform_6(%arg0: i32, %arg1: memref<2xi32, #tpu.memory_space<smem>>) -> (i32, i32) {
    %c0_i32 = arith.constant 0 : i32
    %c0_i32_0 = arith.constant 0 : i32
    %c0_i32_1 = arith.constant 0 : i32
    return %c0_i32, %c0_i32_0 : i32, i32
  }
  func.func @transform_7(%arg0: i32, %arg1: memref<2xi32, #tpu.memory_space<smem>>) -> (i32, i32) {
    %c0_i32 = arith.constant 0 : i32
    %c0_i32_0 = arith.constant 0 : i32
    %c0_i32_1 = arith.constant 0 : i32
    return %c0_i32, %c0_i32_0 : i32, i32
  }
  func.func @transform_8(%arg0: i32, %arg1: memref<2xi32, #tpu.memory_space<smem>>) -> (i32, i32) {
    %c0_i32 = arith.constant 0 : i32
    %c0_i32_0 = arith.constant 0 : i32
    return %arg0, %c0_i32 : i32, i32
  }
  func.func @transform_9(%arg0: i32, %arg1: memref<2xi32, #tpu.memory_space<smem>>) -> (i32, i32) {
    %c0_i32 = arith.constant 0 : i32
    %c0_i32_0 = arith.constant 0 : i32
    return %arg0, %c0_i32 : i32, i32
  }
}

</mosaic_0001>

<llo_original>
// kernel: tpu_custom_call.1
$region0: #{tpu_custom_call.1}
  #allocation0 [shape = 'u32[]', space=smem, size = 0x4, offset = 0x4, fixed_abs, tag = 'smem constant byte address 0x4 - core index']
  #allocation1 [shape = 'u32[144,128]{1,0:T(1,128)}', space=vmem, size = 0x12000, scoped, tag = 'internal scratch']
  #allocation2 [shape = 'f32[64,384]{1,0:T(8,128)}', space=vmem, size = 0x18000, scoped, tag = 'scratch operand']
  #allocation3 [shape = 's32[1]{0}', space=sflag, size = 0x4, scoped, tag = 'scoped memory for tpu_custom_call.1']
  #allocation4 [shape = 'u8[512]{0}', space=smem, size = 0x200, scoped, tag = 'prefetched SMEM operand 0']
  %s0 = inlined_call_operand.vmem [shape: s32[2], index: 0, kind: input, shape index: {}]
  %s1 = inlined_call_operand.vmem [shape: bf16[8,16,32], index: 1, kind: input, shape index: {}]
  %s2 = inlined_call_operand.vmem [shape: f32[1,32], index: 2, kind: input, shape index: {}]
  %s3 = inlined_call_operand.vmem [shape: f32[1,32], index: 3, kind: input, shape index: {}]
  %s4 = inlined_call_operand.hbm [shape: f32[32,384], index: 4, kind: input, shape index: {}]
  %s5 = inlined_call_operand.vmem [shape: bf16[128,256], index: 5, kind: input, shape index: {}]
  %s6 = inlined_call_operand.hbm [shape: bf16[128,128], index: 6, kind: input, shape index: {}]
  %s7 = inlined_call_operand.vmem [shape: f32[128,32], index: 7, kind: input, shape index: {}]
  %s8 = inlined_call_operand.vmem [shape: f32[1,32], index: 8, kind: input, shape index: {}]
  %s9 = inlined_call_operand.vmem [shape: s32[16,1], index: 9, kind: input, shape index: {}]
  %s10 = inlined_call_operand.hbm [shape: f32[16,32], index: 10, kind: output, shape index: {}]
  %s11 = sld [smem:[#allocation0]]
  $region132: #{tpu_custom_call.1} parent=0
    _
  %s13 = ssub.s32 1, %s11
  %s14 = scalar_select 0, %s13, %s11
  %s15 = sshll.u32 %s0, 4
  %s16 = int_to_ptr.vmem [resolvable:$true] %s15
  %18 = dma.vmem_to_smem %s16, 16, [#allocation4], [#allocation3]
  %19 = dma.done [#allocation3], 16
  %20 = sfence
  $region1: #{tpu_custom_call.1} parent=0
    #allocation5 [shape = 'u8[32768]{0}', space=vmem, size = 0x8000, scoped, tag = 'input window, operand 1']
    #allocation6 [shape = 'u8[49152]{0}', space=vmem, size = 0xc000, scoped, tag = 'input window, operand 4, single buffered']
    #allocation7 [shape = 's32[2]{0}', space=sflag, size = 0x8, scoped, tag = 'scoped memory for tpu_custom_call.1']
    #allocation8 [shape = 's32[2]{0}', space=sflag, size = 0x8, scoped, tag = 'scoped memory for tpu_custom_call.1']
    #allocation9 [shape = 'u8[32768]{0}', space=vmem, size = 0x8000, scoped, tag = 'input window, operand 6, single buffered']
    #allocation10 [shape = 's32[1]{0}', space=sflag, size = 0x4, scoped, tag = 'scoped memory for tpu_custom_call.1']
    #allocation11 [shape = 'u8[8192]{0}', space=vmem, size = 0x2000, scoped, tag = 'output window, operand 0']
    %21 = vsyncpa [#allocation7], 0
    %22 = vsyncpa [#allocation10], 0
    %23 = vsyncpa [#allocation8], 0
    %s24 = scalar_lea.sflag [#allocation8], 1
    %25 = vsyncpa %s24, 0
    loop: start=0, step=1, limit=4
    $region2: #{tpu_custom_call.1} parent=1 // loop_pre_header
      _
    $region3: #{tpu_custom_call.1} parent=1 // loop_header
      %s27 = sphi 0, %s31
      %p28 = scmp.ge.s32.totalorder %s27, 4
      %s37 = sphi 0, %s39
      %s40 = sphi 0, %s37
      %s41 = sphi 0, %s40
      %s57 = sphi 0, %s41
      %s61 = sphi 0, %s61
      %s63 = sphi 0, %s61
      %s64 = sphi 0, %s63
      %s78 = sphi 0, %s64
      %s82 = sphi 0, %s82
      %s84 = sphi 0, %s82
      %s85 = sphi 0, %s84
      %s99 = sphi 0, %s85
      %s103 = sphi 0, %s103
      %s105 = sphi 0, %s103
      %s106 = sphi 0, %s105
      %s120 = sphi 0, %s106
      %s124 = sphi 0, %s124
      %s126 = sphi 0, %s124
      %s127 = sphi 0, %s126
      %s141 = sphi 0, %s127
      %s145 = sphi 0, %s145
      %s147 = sphi 0, %s145
      %s148 = sphi 0, %s147
      %s162 = sphi 0, %s148
      %s166 = sphi 0, %s166
      %s168 = sphi 0, %s166
      %s169 = sphi 0, %s168
      %s183 = sphi 0, %s169
      %s187 = sphi 0, %s187
      %s189 = sphi 0, %s187
      %s190 = sphi 0, %s189
      %s204 = sphi 0, %s190
      %s210 = sphi 0, %s212
      %s213 = sphi 0, %s210
      %s214 = sphi 0, %s213
      %s230 = sphi 0, %s214
      %s236 = sphi 0, %s238
      %s239 = sphi 0, %s236
      %s240 = sphi 0, %s239
      %s256 = sphi 0, %s240
    $region4: #{tpu_custom_call.1} parent=1 // loop_header_branch
      %30 = sbr.rel (%p28) target = $region8
    $region5: #{tpu_custom_call.1} parent=1 // loop_body
      %s32 = ssub.s32 %s27, 1
      %s33 = ssub.s32 %s27, 2
      %s34 = sadd.s32 %s27, 1
      %s35 = ssub.s32 %s27, %s34
      %p36 = scmp.eq.s32.totalorder %s35, 0
      %s38 = sadd.s32 %s37, 1
      %s39 = scalar_select %p36, %s37, %s38
      %p42 = pneg %p36
      %p43 = scmp.eq.s32.totalorder %s27, 1
      %p44 = por %p42, %p43
      %p45 = scmp.ne.s32.totalorder %s37, %s40
      %p46 = scmp.eq.s32.totalorder %s27, 0
      %p47 = por %p45, %p46
      %p48 = scmp.ne.s32.totalorder %s37, %s40
      %p49 = scmp.eq.s32.totalorder %s32, 1
      %p50 = por %p48, %p49
      %p51 = scmp.ne.s32.totalorder %s40, %s41
      %p52 = scmp.eq.s32.totalorder %s32, 0
      %p53 = por %p51, %p52
      %p54 = scmp.ne.s32.totalorder %s40, %s41
      %p55 = scmp.eq.s32.totalorder %s33, 1
      %p56 = por %p54, %p55
      %p58 = scmp.ne.s32.totalorder %s41, %s57
      %p59 = scmp.eq.s32.totalorder %s33, 0
      %p60 = por %p58, %p59
      %s62 = sadd.s32 %s61, 1
      %p65 = scmp.eq.s32.totalorder %s27, 1
      %p66 = scmp.ne.s32.totalorder %s61, %s63
      %p67 = scmp.eq.s32.totalorder %s27, 0
      %p68 = por %p66, %p67
      %p69 = scmp.ne.s32.totalorder %s61, %s63
      %p70 = scmp.eq.s32.totalorder %s32, 1
      %p71 = por %p69, %p70
      %p72 = scmp.ne.s32.totalorder %s63, %s64
      %p73 = scmp.eq.s32.totalorder %s32, 0
      %p74 = por %p72, %p73
      %p75 = scmp.ne.s32.totalorder %s63, %s64
      %p76 = scmp.eq.s32.totalorder %s33, 1
      %p77 = por %p75, %p76
      %p79 = scmp.ne.s32.totalorder %s64, %s78
      %p80 = scmp.eq.s32.totalorder %s33, 0
      %p81 = por %p79, %p80
      %s83 = sadd.s32 %s82, 1
      %p86 = scmp.eq.s32.totalorder %s27, 1
      %p87 = scmp.ne.s32.totalorder %s82, %s84
      %p88 = scmp.eq.s32.totalorder %s27, 0
      %p89 = por %p87, %p88
      %p90 = scmp.ne.s32.totalorder %s82, %s84
      %p91 = scmp.eq.s32.totalorder %s32, 1
      %p92 = por %p90, %p91
      %p93 = scmp.ne.s32.totalorder %s84, %s85
      %p94 = scmp.eq.s32.totalorder %s32, 0
      %p95 = por %p93, %p94
      %p96 = scmp.ne.s32.totalorder %s84, %s85
      %p97 = scmp.eq.s32.totalorder %s33, 1
      %p98 = por %p96, %p97
      %p100 = scmp.ne.s32.totalorder %s85, %s99
      %p101 = scmp.eq.s32.totalorder %s33, 0
      %p102 = por %p100, %p101
      %s104 = sadd.s32 %s103, 1
      %p107 = scmp.eq.s32.totalorder %s27, 1
      %p108 = scmp.ne.s32.totalorder %s103, %s105
      %p109 = scmp.eq.s32.totalorder %s27, 0
      %p110 = por %p108, %p109
      %p111 = scmp.ne.s32.totalorder %s103, %s105
      %p112 = scmp.eq.s32.totalorder %s32, 1
      %p113 = por %p111, %p112
      %p114 = scmp.ne.s32.totalorder %s105, %s106
      %p115 = scmp.eq.s32.totalorder %s32, 0
      %p116 = por %p114, %p115
      %p117 = scmp.ne.s32.totalorder %s105, %s106
      %p118 = scmp.eq.s32.totalorder %s33, 1
      %p119 = por %p117, %p118
      %p121 = scmp.ne.s32.totalorder %s106, %s120
      %p122 = scmp.eq.s32.totalorder %s33, 0
      %p123 = por %p121, %p122
      %s125 = sadd.s32 %s124, 1
      %p128 = scmp.eq.s32.totalorder %s27, 1
      %p129 = scmp.ne.s32.totalorder %s124, %s126
      %p130 = scmp.eq.s32.totalorder %s27, 0
      %p131 = por %p129, %p130
      %p132 = scmp.ne.s32.totalorder %s124, %s126
      %p133 = scmp.eq.s32.totalorder %s32, 1
      %p134 = por %p132, %p133
      %p135 = scmp.ne.s32.totalorder %s126, %s127
      %p136 = scmp.eq.s32.totalorder %s32, 0
      %p137 = por %p135, %p136
      %p138 = scmp.ne.s32.totalorder %s126, %s127
      %p139 = scmp.eq.s32.totalorder %s33, 1
      %p140 = por %p138, %p139
      %p142 = scmp.ne.s32.totalorder %s127, %s141
      %p143 = scmp.eq.s32.totalorder %s33, 0
      %p144 = por %p142, %p143
      %s146 = sadd.s32 %s145, 1
      %p149 = scmp.eq.s32.totalorder %s27, 1
      %p150 = scmp.ne.s32.totalorder %s145, %s147
      %p151 = scmp.eq.s32.totalorder %s27, 0
      %p152 = por %p150, %p151
      %p153 = scmp.ne.s32.totalorder %s145, %s147
      %p154 = scmp.eq.s32.totalorder %s32, 1
      %p155 = por %p153, %p154
      %p156 = scmp.ne.s32.totalorder %s147, %s148
      %p157 = scmp.eq.s32.totalorder %s32, 0
      %p158 = por %p156, %p157
      %p159 = scmp.ne.s32.totalorder %s147, %s148
      %p160 = scmp.eq.s32.totalorder %s33, 1
      %p161 = por %p159, %p160
      %p163 = scmp.ne.s32.totalorder %s148, %s162
      %p164 = scmp.eq.s32.totalorder %s33, 0
      %p165 = por %p163, %p164
      %s167 = sadd.s32 %s166, 1
      %p170 = scmp.eq.s32.totalorder %s27, 1
      %p171 = scmp.ne.s32.totalorder %s166, %s168
      %p172 = scmp.eq.s32.totalorder %s27, 0
      %p173 = por %p171, %p172
      %p174 = scmp.ne.s32.totalorder %s166, %s168
      %p175 = scmp.eq.s32.totalorder %s32, 1
      %p176 = por %p174, %p175
      %p177 = scmp.ne.s32.totalorder %s168, %s169
      %p178 = scmp.eq.s32.totalorder %s32, 0
      %p179 = por %p177, %p178
      %p180 = scmp.ne.s32.totalorder %s168, %s169
      %p181 = scmp.eq.s32.totalorder %s33, 1
      %p182 = por %p180, %p181
      %p184 = scmp.ne.s32.totalorder %s169, %s183
      %p185 = scmp.eq.s32.totalorder %s33, 0
      %p186 = por %p184, %p185
      %s188 = sadd.s32 %s187, 1
      %p191 = scmp.eq.s32.totalorder %s27, 1
      %p192 = scmp.ne.s32.totalorder %s187, %s189
      %p193 = scmp.eq.s32.totalorder %s27, 0
      %p194 = por %p192, %p193
      %p195 = scmp.ne.s32.totalorder %s187, %s189
      %p196 = scmp.eq.s32.totalorder %s32, 1
      %p197 = por %p195, %p196
      %p198 = scmp.ne.s32.totalorder %s189, %s190
      %p199 = scmp.eq.s32.totalorder %s32, 0
      %p200 = por %p198, %p199
      %p201 = scmp.ne.s32.totalorder %s189, %s190
      %p202 = scmp.eq.s32.totalorder %s33, 1
      %p203 = por %p201, %p202
      %p205 = scmp.ne.s32.totalorder %s190, %s204
      %p206 = scmp.eq.s32.totalorder %s33, 0
      %p207 = por %p205, %p206
      %s208 = ssub.s32 %s27, %s34
      %p209 = scmp.eq.s32.totalorder %s208, 0
      %s211 = sadd.s32 %s210, 1
      %s212 = scalar_select %p209, %s210, %s211
      %p215 = pneg %p209
      %p216 = scmp.eq.s32.totalorder %s27, 1
      %p217 = por %p215, %p216
      %p218 = scmp.ne.s32.totalorder %s210, %s213
      %p219 = scmp.eq.s32.totalorder %s27, 0
      %p220 = por %p218, %p219
      %p221 = scmp.ne.s32.totalorder %s210, %s213
      %p222 = scmp.eq.s32.totalorder %s32, 1
      %p223 = por %p221, %p222
      %p224 = scmp.ne.s32.totalorder %s213, %s214
      %p225 = scmp.eq.s32.totalorder %s32, 0
      %p226 = por %p224, %p225
      %p227 = scmp.ne.s32.totalorder %s213, %s214
      %p228 = scmp.eq.s32.totalorder %s33, 1
      %p229 = por %p227, %p228
      %p231 = scmp.ne.s32.totalorder %s214, %s230
      %p232 = scmp.eq.s32.totalorder %s33, 0
      %p233 = por %p231, %p232
      %s234 = ssub.s32 %s27, %s34
      %p235 = scmp.eq.s32.totalorder %s234, 0
      %s237 = sadd.s32 %s236, 1
      %s238 = scalar_select %p235, %s236, %s237
      %p241 = pneg %p235
      %p242 = scmp.eq.s32.totalorder %s27, 1
      %p243 = por %p241, %p242
      %p244 = scmp.ne.s32.totalorder %s236, %s239
      %p245 = scmp.eq.s32.totalorder %s27, 0
      %p246 = por %p244, %p245
      %p247 = scmp.ne.s32.totalorder %s236, %s239
      %p248 = scmp.eq.s32.totalorder %s32, 1
      %p249 = por %p247, %p248
      %p250 = scmp.ne.s32.totalorder %s239, %s240
      %p251 = scmp.eq.s32.totalorder %s32, 0
      %p252 = por %p250, %p251
      %p253 = scmp.ne.s32.totalorder %s239, %s240
      %p254 = scmp.eq.s32.totalorder %s33, 1
      %p255 = por %p253, %p254
      %p257 = scmp.ne.s32.totalorder %s240, %s256
      %p258 = scmp.eq.s32.totalorder %s33, 0
      %p259 = por %p257, %p258
      %p260 = scmp.le.s32.totalorder 1, %s27
      %p261 = scmp.lt.s32.totalorder %s27, 3
      %p262 = pnand %p260, %p261
      %p263 = pneg %p262
      // Predicated region
      $region9: #{tpu_custom_call.1} parent=5 // pred_check
        _
      $region10: #{tpu_custom_call.1} parent=5 // pred_check_branch
        %265 = sbr.rel (%p262) target = $region12
      $region11: #{tpu_custom_call.1} parent=5 // pred_region
        %s266 = ssub.s32 %s27, 1
        // Predicated region
        $region13: #{tpu_custom_call.1} parent=11 // pred_check
          %p267 = pneg %p74
        $region14: #{tpu_custom_call.1} parent=11 // pred_check_branch
          %269 = sbr.rel (%p267) target = $region16
        $region15: #{tpu_custom_call.1} parent=11 // pred_region
          _
        $region16: #{tpu_custom_call.1} parent=11 // pred_fallthru
          _
        // Predicated region
        $region17: #{tpu_custom_call.1} parent=11 // pred_check
          %p270 = pneg %p95
        $region18: #{tpu_custom_call.1} parent=11 // pred_check_branch
          %272 = sbr.rel (%p270) target = $region20
        $region19: #{tpu_custom_call.1} parent=11 // pred_region
          _
        $region20: #{tpu_custom_call.1} parent=11 // pred_fallthru
          _
        // Predicated region
        $region21: #{tpu_custom_call.1} parent=11 // pred_check
          %p273 = pneg %p116
        $region22: #{tpu_custom_call.1} parent=11 // pred_check_branch
          %275 = sbr.rel (%p273) target = $region24
        $region23: #{tpu_custom_call.1} parent=11 // pred_region
          %s277 = ssub.s32 1536, 1536
          %278 = vsyncadd [#allocation7], %s277
          %s279 = sshll.u32 [#allocation6], 4
          %s280 = int_to_ptr.vmem [resolvable:$true] %s279
          %285 = dma.hbm_to_vmem [thread:$0]  %s4, 1536, %s280, [#allocation7], 384, 384, 24
        $region24: #{tpu_custom_call.1} parent=11 // pred_fallthru
          _
        // Predicated region
        $region25: #{tpu_custom_call.1} parent=11 // pred_check
          %p286 = pneg %p137
        $region26: #{tpu_custom_call.1} parent=11 // pred_check_branch
          %288 = sbr.rel (%p286) target = $region28
        $region27: #{tpu_custom_call.1} parent=11 // pred_region
          _
        $region28: #{tpu_custom_call.1} parent=11 // pred_fallthru
          _
        // Predicated region
        $region29: #{tpu_custom_call.1} parent=11 // pred_check
          %p289 = pneg %p158
        $region30: #{tpu_custom_call.1} parent=11 // pred_check_branch
          %291 = sbr.rel (%p289) target = $region32
        $region31: #{tpu_custom_call.1} parent=11 // pred_region
          %s293 = ssub.s32 1024, 1024
          %294 = vsyncadd [#allocation10], %s293
          %s295 = sshll.u32 [#allocation9], 4
          %s296 = int_to_ptr.vmem [resolvable:$true] %s295
          %301 = dma.hbm_to_vmem [thread:$0]  %s6, 1024, %s296, [#allocation10], 64, 64, 4
        $region32: #{tpu_custom_call.1} parent=11 // pred_fallthru
          _
        // Predicated region
        $region33: #{tpu_custom_call.1} parent=11 // pred_check
          %p302 = pneg %p179
        $region34: #{tpu_custom_call.1} parent=11 // pred_check_branch
          %304 = sbr.rel (%p302) target = $region36
        $region35: #{tpu_custom_call.1} parent=11 // pred_region
          _
        $region36: #{tpu_custom_call.1} parent=11 // pred_fallthru
          _
        // Predicated region
        $region37: #{tpu_custom_call.1} parent=11 // pred_check
          %p305 = pneg %p200
        $region38: #{tpu_custom_call.1} parent=11 // pred_check_branch
          %307 = sbr.rel (%p305) target = $region40
        $region39: #{tpu_custom_call.1} parent=11 // pred_region
          _
        $region40: #{tpu_custom_call.1} parent=11 // pred_fallthru
          _
      $region12: #{tpu_custom_call.1} parent=5 // pred_fallthru
        _
      %p308 = scmp.lt.s32.totalorder %s27, 2
      // Predicated region
      $region41: #{tpu_custom_call.1} parent=5 // pred_check
        %p309 = pneg %p308
      $region42: #{tpu_custom_call.1} parent=5 // pred_check_branch
        %311 = sbr.rel (%p309) target = $region44
      $region43: #{tpu_custom_call.1} parent=5 // pred_region
        // Predicated region
        $region45: #{tpu_custom_call.1} parent=43 // pred_check
          %p312 = pneg %p47
        $region46: #{tpu_custom_call.1} parent=43 // pred_check_branch
          %314 = sbr.rel (%p312) target = $region48
        $region47: #{tpu_custom_call.1} parent=43 // pred_region
          %s315 = sand.u32 %s37, 1
          %s316 = sand.u32 %s37, 1
          %s317 = smul.addr %s316, 32
          %s318 = scalar_lea.vmem [#allocation5], %s317
          %s319 = smul.addr %s27, 4
          %s320 = scalar_lea.vmem %s1, %s319
          // Predicated region
          $region49: #{tpu_custom_call.1} parent=47 // pred_check
            _
          $region50: #{tpu_custom_call.1} parent=47 // pred_check_branch
            %322 = sbr.rel (0) target = $region52
          $region51: #{tpu_custom_call.1} parent=47 // pred_region
            // Predicated region
            $region53: #{tpu_custom_call.1} parent=51 // pred_check
              _
            $region54: #{tpu_custom_call.1} parent=51 // pred_check_branch
              %324 = sbr.rel target = $region56
            $region55: #{tpu_custom_call.1} parent=51 // pred_region
              // Predicated region
              $region68: #{tpu_custom_call.1} parent=55 // pred_check
                _
              $region69: #{tpu_custom_call.1} parent=55 // pred_check_branch
                %353 = sbr.rel (0) target = $region71
              $region70: #{tpu_custom_call.1} parent=55 // pred_region
                loop: start=0, step=1, limit=1
                $region72: #{tpu_custom_call.1} parent=70 // loop_pre_header
                  _
                $region73: #{tpu_custom_call.1} parent=70 // loop_header
                  %s355 = sphi 0, %s359
                  %p356 = scmp.ge.s32.totalorder %s355, 1
                  %s360 = sphi %s320, %s320
                  %s361 = sphi %s318, %s318
                $region74: #{tpu_custom_call.1} parent=70 // loop_header_branch
                  %358 = sbr.rel (%p356) target = $region78
                $region75: #{tpu_custom_call.1} parent=70 // loop_body
                  _
                $region76: #{tpu_custom_call.1} parent=70 // loop_footer
                  %s359 = sadd.s32 1, %s355
                $region77: #{tpu_custom_call.1} parent=70 // loop_footer_branch
                  %354 = sbr.rel target = $region73
                $region78: #{tpu_custom_call.1} parent=70 // loop_exit
                  _
                loop: start=0, step=1, limit=1
                $region79: #{tpu_custom_call.1} parent=70 // loop_pre_header
                  _
                $region80: #{tpu_custom_call.1} parent=70 // loop_header
                  %s364 = sphi 0, %s368
                  %p365 = scmp.ge.s32.totalorder %s364, 1
                  %s369 = sphi %s320, %s320
                  %s370 = sphi %s318, %s318
                $region81: #{tpu_custom_call.1} parent=70 // loop_header_branch
                  %367 = sbr.rel (%p365) target = $region85
                $region82: #{tpu_custom_call.1} parent=70 // loop_body
                  %v371 = vld [vmem:[%s369] sm:$0xf]
                  %372 = vst [vmem:[%s370] sm:$0xf] %v371
                  %v373 = vld [vmem:[%s369 + $0x8] sm:$0xf]
                  %374 = vst [vmem:[%s370 + $0x4] sm:$0xf] %v373
                  %v375 = vld [vmem:[%s369 + $0x10] sm:$0xf]
                  %376 = vst [vmem:[%s370 + $0x8] sm:$0xf] %v375
                  %v377 = vld [vmem:[%s369 + $0x18] sm:$0xf]
                  %378 = vst [vmem:[%s370 + $0xc] sm:$0xf] %v377
                  %v379 = vld [vmem:[%s369 + $0x20] sm:$0xf]
                  %380 = vst [vmem:[%s370 + $0x10] sm:$0xf] %v379
                  %v381 = vld [vmem:[%s369 + $0x28] sm:$0xf]
                  %382 = vst [vmem:[%s370 + $0x14] sm:$0xf] %v381
                  %v383 = vld [vmem:[%s369 + $0x30] sm:$0xf]
                  %384 = vst [vmem:[%s370 + $0x18] sm:$0xf] %v383
                  %v385 = vld [vmem:[%s369 + $0x38] sm:$0xf]
                  %386 = vst [vmem:[%s370 + $0x1c] sm:$0xf] %v385
                $region83: #{tpu_custom_call.1} parent=70 // loop_footer
                  %s368 = sadd.s32 1, %s364
                $region84: #{tpu_custom_call.1} parent=70 // loop_footer_branch
                  %363 = sbr.rel target = $region80
                $region85: #{tpu_custom_call.1} parent=70 // loop_exit
                  _
              $region71: #{tpu_custom_call.1} parent=55 // pred_fallthru
                _
            $region56: #{tpu_custom_call.1} parent=51 // pred_fallthru
              _
            // Predicated region
            $region57: #{tpu_custom_call.1} parent=51 // pred_check
              _
            $region58: #{tpu_custom_call.1} parent=51 // pred_check_branch
              %326 = sbr.rel (0) target = $region60
            $region59: #{tpu_custom_call.1} parent=51 // pred_region
              loop: start=0, step=1, limit=1
              $region61: #{tpu_custom_call.1} parent=59 // loop_pre_header
                _
              $region62: #{tpu_custom_call.1} parent=59 // loop_header
                %s329 = sphi 0, %s333
                %p330 = scmp.ge.s32.totalorder %s329, 1
                %s334 = sphi %s320, %s320
                %s335 = sphi %s318, %s318
              $region63: #{tpu_custom_call.1} parent=59 // loop_header_branch
                %332 = sbr.rel (%p330) target = $region67
              $region64: #{tpu_custom_call.1} parent=59 // loop_body
                %v336 = vld [vmem:[%s334] sm:$0xf]
                %337 = vst [vmem:[%s335] sm:$0xf] %v336
                %v338 = vld [vmem:[%s334 + $0x8] sm:$0xf]
                %339 = vst [vmem:[%s335 + $0x4] sm:$0xf] %v338
                %v340 = vld [vmem:[%s334 + $0x10] sm:$0xf]
                %341 = vst [vmem:[%s335 + $0x8] sm:$0xf] %v340
                %v342 = vld [vmem:[%s334 + $0x18] sm:$0xf]
                %343 = vst [vmem:[%s335 + $0xc] sm:$0xf] %v342
                %v344 = vld [vmem:[%s334 + $0x20] sm:$0xf]
                %345 = vst [vmem:[%s335 + $0x10] sm:$0xf] %v344
                %v346 = vld [vmem:[%s334 + $0x28] sm:$0xf]
                %347 = vst [vmem:[%s335 + $0x14] sm:$0xf] %v346
                %v348 = vld [vmem:[%s334 + $0x30] sm:$0xf]
                %349 = vst [vmem:[%s335 + $0x18] sm:$0xf] %v348
                %v350 = vld [vmem:[%s334 + $0x38] sm:$0xf]
                %351 = vst [vmem:[%s335 + $0x1c] sm:$0xf] %v350
              $region65: #{tpu_custom_call.1} parent=59 // loop_footer
                %s333 = sadd.s32 1, %s329
              $region66: #{tpu_custom_call.1} parent=59 // loop_footer_branch
                %328 = sbr.rel target = $region62
              $region67: #{tpu_custom_call.1} parent=59 // loop_exit
                _
            $region60: #{tpu_custom_call.1} parent=51 // pred_fallthru
              _
          $region52: #{tpu_custom_call.1} parent=47 // pred_fallthru
            _
          %387 = vnop
        $region48: #{tpu_custom_call.1} parent=43 // pred_fallthru
          _
        // Predicated region
        $region86: #{tpu_custom_call.1} parent=43 // pred_check
          %p388 = pneg %p220
        $region87: #{tpu_custom_call.1} parent=43 // pred_check_branch
          %390 = sbr.rel (%p388) target = $region89
        $region88: #{tpu_custom_call.1} parent=43 // pred_region
          %p391 = scmp.lt.s32.totalorder %s27, 1
          %s392 = scalar_select %p391, %s27, 1
          %s393 = smul.addr %s392, 8
          %s394 = scalar_lea.vmem %s9, %s393
        $region89: #{tpu_custom_call.1} parent=43 // pred_fallthru
          _
      $region44: #{tpu_custom_call.1} parent=5 // pred_fallthru
        _
      %p395 = scmp.le.s32.totalorder 1, %s27
      %p396 = scmp.lt.s32.totalorder %s27, 3
      %p397 = pnand %p395, %p396
      %p398 = pneg %p397
      // Predicated region
      $region90: #{tpu_custom_call.1} parent=5 // pred_check
        _
      $region91: #{tpu_custom_call.1} parent=5 // pred_check_branch
        %400 = sbr.rel (%p397) target = $region93
      $region92: #{tpu_custom_call.1} parent=5 // pred_region
        %s401 = ssub.s32 %s27, 1
        %s402 = sand.u32 %s40, 1
        %s403 = sand.u32 %s40, 1
        %s404 = smul.addr %s403, 32
        %s405 = scalar_lea.vmem [#allocation5], %s404
        // Predicated region
        $region94: #{tpu_custom_call.1} parent=92 // pred_check
          %p406 = pneg %p53
        $region95: #{tpu_custom_call.1} parent=92 // pred_check_branch
          %408 = sbr.rel (%p406) target = $region97
        $region96: #{tpu_custom_call.1} parent=92 // pred_region
          _
        $region97: #{tpu_custom_call.1} parent=92 // pred_fallthru
          _
        // Predicated region
        $region98: #{tpu_custom_call.1} parent=92 // pred_check
          %p409 = pneg %p116
        $region99: #{tpu_custom_call.1} parent=92 // pred_check_branch
          %411 = sbr.rel (%p409) target = $region101
        $region100: #{tpu_custom_call.1} parent=92 // pred_region
          %412 = dma.done [#allocation7], 1536
        $region101: #{tpu_custom_call.1} parent=92 // pred_fallthru
          _
        // Predicated region
        $region102: #{tpu_custom_call.1} parent=92 // pred_check
          %p413 = pneg %p158
        $region103: #{tpu_custom_call.1} parent=92 // pred_check_branch
          %415 = sbr.rel (%p413) target = $region105
        $region104: #{tpu_custom_call.1} parent=92 // pred_region
          %416 = dma.done [#allocation10], 1024
        $region105: #{tpu_custom_call.1} parent=92 // pred_fallthru
          _
        %s417 = sand.u32 %s40, 1
        %s418 = sand.u32 %s40, 1
        %s419 = smul.addr %s418, 32
        %s420 = scalar_lea.vmem [#allocation5], %s419
        %p421 = pneg %p53
        %p422 = pneg %p50
        %p423 = pneg %p74
        %p424 = pneg %p71
        %p425 = pneg %p95
        %p426 = pneg %p92
        %p427 = pneg %p116
        %p428 = pneg %p113
        %p429 = pneg %p137
        %p430 = pneg %p134
        %p431 = pneg %p158
        %p432 = pneg %p155
        %p433 = pneg %p179
        %p434 = pneg %p176
        %p435 = pneg %p200
        %p436 = pneg %p197
        %p437 = scmp.lt.s32.totalorder %s32, 1
        %s438 = scalar_select %p437, %s32, 1
        %s439 = smul.addr %s438, 8
        %s440 = scalar_lea.vmem %s9, %s439
        %p441 = pneg %p226
        %p442 = pneg %p223
        %p443 = pneg %p252
        %p444 = pneg %p249
        %s445 = sand.u32 %s239, 1
        %s446 = scalar_lea.sflag [#allocation8], %s445
        %s447 = sand.u32 %s239, 1
        %s448 = smul.addr %s447, 8
        %s449 = scalar_lea.vmem [#allocation11], %s448
        %p450 = scmp.lt.s32.totalorder %s32, 1
        %s451 = scalar_select %p450, %s32, 1
        %s452 = smul.addr %s451, 8
        %s453 = scalar_lea.vmem %s9, %s452
        %v455 = vld [vmem:[%s2] sm:$0x1]
        %v456 = vld [vmem:[%s3] sm:$0x1]
        %v457 = vld [vmem:[#allocation6] sm:$0xff]
        %v458 = vld [vmem:[#allocation6 + $0x8] sm:$0xff]
        %v459 = vld [vmem:[#allocation6 + $0x10] sm:$0xff]
        %v460 = vld [vmem:[#allocation6 + $0x18] sm:$0xff]
        %v461 = vld [vmem:[#allocation6 + $0x20] sm:$0xff]
        %v462 = vld [vmem:[#allocation6 + $0x28] sm:$0xff]
        %v463 = vld [vmem:[#allocation6 + $0x30] sm:$0xff]
        %v464 = vld [vmem:[#allocation6 + $0x38] sm:$0xff]
        %v465 = vld [vmem:[#allocation6 + $0x40] sm:$0xff]
        %v466 = vld [vmem:[#allocation6 + $0x48] sm:$0xff]
        %v467 = vld [vmem:[#allocation6 + $0x50] sm:$0xff]
        %v468 = vld [vmem:[#allocation6 + $0x58] sm:$0xff]
        %v469 = vld [vmem:[%s5] sm:$0xff]
        %v470 = vld [vmem:[%s5 + $0x8] sm:$0xff]
        %v471 = vld [vmem:[%s5 + $0x10] sm:$0xff]
        %v472 = vld [vmem:[%s5 + $0x18] sm:$0xff]
        %v473 = vld [vmem:[%s5 + $0x20] sm:$0xff]
        %v474 = vld [vmem:[%s5 + $0x28] sm:$0xff]
        %v475 = vld [vmem:[%s5 + $0x30] sm:$0xff]
        %v476 = vld [vmem:[%s5 + $0x38] sm:$0xff]
        %v477 = vld [vmem:[%s5 + $0x40] sm:$0xff]
        %v478 = vld [vmem:[%s5 + $0x48] sm:$0xff]
        %v479 = vld [vmem:[%s5 + $0x50] sm:$0xff]
        %v480 = vld [vmem:[%s5 + $0x58] sm:$0xff]
        %v481 = vld [vmem:[%s5 + $0x60] sm:$0xff]
        %v482 = vld [vmem:[%s5 + $0x68] sm:$0xff]
        %v483 = vld [vmem:[%s5 + $0x70] sm:$0xff]
        %v484 = vld [vmem:[%s5 + $0x78] sm:$0xff]
        %v485 = vld [vmem:[#allocation9] sm:$0xf]
        %v486 = vld [vmem:[#allocation9 + $0x4] sm:$0xf]
        %v487 = vld [vmem:[#allocation9 + $0x8] sm:$0xf]
        %v488 = vld [vmem:[#allocation9 + $0xc] sm:$0xf]
        %v489 = vld [vmem:[#allocation9 + $0x10] sm:$0xf]
        %v490 = vld [vmem:[#allocation9 + $0x14] sm:$0xf]
        %v491 = vld [vmem:[#allocation9 + $0x18] sm:$0xf]
        %v492 = vld [vmem:[#allocation9 + $0x1c] sm:$0xf]
        %v493 = vld [vmem:[#allocation9 + $0x20] sm:$0xf]
        %v494 = vld [vmem:[#allocation9 + $0x24] sm:$0xf]
        %v495 = vld [vmem:[#allocation9 + $0x28] sm:$0xf]
        %v496 = vld [vmem:[#allocation9 + $0x2c] sm:$0xf]
        %v497 = vld [vmem:[#allocation9 + $0x30] sm:$0xf]
        %v498 = vld [vmem:[#allocation9 + $0x34] sm:$0xf]
        %v499 = vld [vmem:[#allocation9 + $0x38] sm:$0xf]
        %v500 = vld [vmem:[#allocation9 + $0x3c] sm:$0xf]
        %s501 = sld [smem:[#allocation4 + %s32]]
        %s502 = sadd.s32 %s501, 7
        %p503 = scmp.lt.s32.totalorder %s502, 0
        %s504 = ssub.s32 0, %s502
        %s505 = scalar_select %p503, %s504, %s502
        %s506 = sshrl.u32 %s505, 3
        %s507 = ssub.s32 0, %s506
        %s508 = scalar_select %p503, %s507, %s506
        // While loop
        $region106: #{tpu_custom_call.1} parent=92 // loop_pre_header
          _
        $region107: #{tpu_custom_call.1} parent=92 // loop_header
          %s510 = sphi 0, %s512
          %p511 = scmp.ge.s32.totalorder %s510, %s508
        $region108: #{tpu_custom_call.1} parent=92 // loop_header_branch
          %514 = sbr.rel (%p511) target = $region112
        $region109: #{tpu_custom_call.1} parent=92 // loop_body
          %s515 = smul.u32 %s510, 8
          %s516 = smul.addr %s515, 4
          %s517 = scalar_lea.vmem %s405, %s516 [#allocation5]
          %v518 = vld [vmem:[%s517] sm:$0xf]
          %v519 = vld [vmem:[%s517 + $0x4] sm:$0xf]
          %v520 = vld [vmem:[%s517 + $0x8] sm:$0xf]
          %v521 = vld [vmem:[%s517 + $0xc] sm:$0xf]
          %v522 = vld [vmem:[%s517 + $0x10] sm:$0xf]
          %v523 = vld [vmem:[%s517 + $0x14] sm:$0xf]
          %v524 = vld [vmem:[%s517 + $0x18] sm:$0xf]
          %v525 = vld [vmem:[%s517 + $0x1c] sm:$0xf]
          %v526 = vunpack.c.l.bf16 %v518
          %v527 = vunpack.c.l.bf16 %v519
          %v528 = vunpack.c.l.bf16 %v520
          %v529 = vunpack.c.l.bf16 %v521
          %v530 = vunpack.c.l.bf16 %v522
          %v531 = vunpack.c.l.bf16 %v523
          %v532 = vunpack.c.l.bf16 %v524
          %v533 = vunpack.c.l.bf16 %v525
          %vm534 = vcmask 261120
          %v535 = vsel %vm534, %v526, 0.0
          %536 = vadd.xlane.f32.xlu0 %v535
          %v537 = vpop.xlane.xlu0 %536
          %v538 = vsel %vm534, %v527, 0.0
          %539 = vadd.xlane.f32.xlu0 %v538
          %v540 = vpop.xlane.xlu0 %539
          %v541 = vsel %vm534, %v528, 0.0
          %542 = vadd.xlane.f32.xlu0 %v541
          %v543 = vpop.xlane.xlu0 %542
          %v544 = vsel %vm534, %v529, 0.0
          %545 = vadd.xlane.f32.xlu0 %v544
          %v546 = vpop.xlane.xlu0 %545
          %v547 = vsel %vm534, %v530, 0.0
          %548 = vadd.xlane.f32.xlu0 %v547
          %v549 = vpop.xlane.xlu0 %548
          %v550 = vsel %vm534, %v531, 0.0
          %551 = vadd.xlane.f32.xlu0 %v550
          %v552 = vpop.xlane.xlu0 %551
          %v553 = vsel %vm534, %v532, 0.0
          %554 = vadd.xlane.f32.xlu0 %v553
          %v555 = vpop.xlane.xlu0 %554
          %v556 = vsel %vm534, %v533, 0.0
          %557 = vadd.xlane.f32.xlu0 %v556
          %v558 = vpop.xlane.xlu0 %557
          %v559 = vrcp.pop 32.0
          %v560 = vmul.f32 %v537, %v559
          %v561 = vmul.f32 %v540, %v559
          %v562 = vmul.f32 %v543, %v559
          %v563 = vmul.f32 %v546, %v559
          %v564 = vmul.f32 %v549, %v559
          %v565 = vmul.f32 %v552, %v559
          %v566 = vmul.f32 %v555, %v559
          %v567 = vmul.f32 %v558, %v559
          %v568 = vsub.f32 %v526, %v560
          %v569 = vsub.f32 %v527, %v561
          %v570 = vsub.f32 %v528, %v562
          %v571 = vsub.f32 %v529, %v563
          %v572 = vsub.f32 %v530, %v564
          %v573 = vsub.f32 %v531, %v565
          %v574 = vsub.f32 %v532, %v566
          %v575 = vsub.f32 %v533, %v567
          %v576 = vmul.f32 %v568, %v568
          %v577 = vmul.f32 %v569, %v569
          %v578 = vmul.f32 %v570, %v570
          %v579 = vmul.f32 %v571, %v571
          %v580 = vmul.f32 %v572, %v572
          %v581 = vmul.f32 %v573, %v573
          %v582 = vmul.f32 %v574, %v574
          %v583 = vmul.f32 %v575, %v575
          %v584 = vsel %vm534, %v576, 0.0
          %585 = vadd.xlane.f32.xlu0 %v584
          %v586 = vpop.xlane.xlu0 %585
          %v587 = vsel %vm534, %v577, 0.0
          %588 = vadd.xlane.f32.xlu0 %v587
          %v589 = vpop.xlane.xlu0 %588
          %v590 = vsel %vm534, %v578, 0.0
          %591 = vadd.xlane.f32.xlu0 %v590
          %v592 = vpop.xlane.xlu0 %591
          %v593 = vsel %vm534, %v579, 0.0
          %594 = vadd.xlane.f32.xlu0 %v593
          %v595 = vpop.xlane.xlu0 %594
          %v596 = vsel %vm534, %v580, 0.0
          %597 = vadd.xlane.f32.xlu0 %v596
          %v598 = vpop.xlane.xlu0 %597
          %v599 = vsel %vm534, %v581, 0.0
          %600 = vadd.xlane.f32.xlu0 %v599
          %v601 = vpop.xlane.xlu0 %600
          %v602 = vsel %vm534, %v582, 0.0
          %603 = vadd.xlane.f32.xlu0 %v602
          %v604 = vpop.xlane.xlu0 %603
          %v605 = vsel %vm534, %v583, 0.0
          %606 = vadd.xlane.f32.xlu0 %v605
          %v607 = vpop.xlane.xlu0 %606
          %v608 = vmul.f32 %v586, %v559
          %v609 = vmul.f32 %v589, %v559
          %v610 = vmul.f32 %v592, %v559
          %v611 = vmul.f32 %v595, %v559
          %v612 = vmul.f32 %v598, %v559
          %v613 = vmul.f32 %v601, %v559
          %v614 = vmul.f32 %v604, %v559
          %v615 = vmul.f32 %v607, %v559
          %v616 = vadd.f32 %v608, 1e-05
          %v617 = vadd.f32 %v609, 1e-05
          %v618 = vadd.f32 %v610, 1e-05
          %v619 = vadd.f32 %v611, 1e-05
          %v620 = vadd.f32 %v612, 1e-05
          %v621 = vadd.f32 %v613, 1e-05
          %v622 = vadd.f32 %v614, 1e-05
          %v623 = vadd.f32 %v615, 1e-05
          %v624 = vrsqrt.pop %v616
          %v625 = vrsqrt.pop %v617
          %v626 = vrsqrt.pop %v618
          %v627 = vrsqrt.pop %v619
          %v628 = vrsqrt.pop %v620
          %v629 = vrsqrt.pop %v621
          %v630 = vrsqrt.pop %v622
          %v631 = vrsqrt.pop %v623
          %v632 = vmul.f32 %v568, %v624
          %v633 = vmul.f32 %v569, %v625
          %v634 = vmul.f32 %v570, %v626
          %v635 = vmul.f32 %v571, %v627
          %v636 = vmul.f32 %v572, %v628
          %v637 = vmul.f32 %v573, %v629
          %v638 = vmul.f32 %v574, %v630
          %v639 = vmul.f32 %v575, %v631
          %v641 = vlaneseq
          %v642 = vshrl.u32 %v641, 7
          %v643 = vsub.s32 0, %v642
          %v644 = vrot.slane %v455, %v643
          %v646 = vmul.f32 %v632, %v644
          %v647 = vmul.f32 %v633, %v644
          %v648 = vmul.f32 %v634, %v644
          %v649 = vmul.f32 %v635, %v644
          %v650 = vmul.f32 %v636, %v644
          %v651 = vmul.f32 %v637, %v644
          %v652 = vmul.f32 %v638, %v644
          %v653 = vmul.f32 %v639, %v644
          %v655 = vlaneseq
          %v656 = vshrl.u32 %v655, 7
          %v657 = vsub.s32 0, %v656
          %v658 = vrot.slane %v456, %v657
          %v660 = vadd.f32 %v646, %v658
          %v661 = vadd.f32 %v647, %v658
          %v662 = vadd.f32 %v648, %v658
          %v663 = vadd.f32 %v649, %v658
          %v664 = vadd.f32 %v650, %v658
          %v665 = vadd.f32 %v651, %v658
          %v666 = vadd.f32 %v652, %v658
          %v667 = vadd.f32 %v653, %v658
          %v668 = vmul.f32 %v660, 0.5
          %v669 = vmul.f32 %v661, 0.5
          %v670 = vmul.f32 %v662, 0.5
          %v671 = vmul.f32 %v663, 0.5
          %v672 = vmul.f32 %v664, 0.5
          %v673 = vmul.f32 %v665, 0.5
          %v674 = vmul.f32 %v666, 0.5
          %v675 = vmul.f32 %v667, 0.5
          %v676 = vadd.f32 %v668, 0.0
          %v677 = vadd.f32 %v669, 0.0
          %v678 = vadd.f32 %v670, 0.0
          %v679 = vadd.f32 %v671, 0.0
          %v680 = vadd.f32 %v672, 0.0
          %v681 = vadd.f32 %v673, 0.0
          %v682 = vadd.f32 %v674, 0.0
          %v683 = vadd.f32 %v675, 0.0
          %vm684 = vcmp.ge.f32.partialorder %v676, 1.0
          %vm685 = vcmp.ge.f32.partialorder %v677, 1.0
          %vm686 = vcmp.ge.f32.partialorder %v678, 1.0
          %vm687 = vcmp.ge.f32.partialorder %v679, 1.0
          %vm688 = vcmp.ge.f32.partialorder %v680, 1.0
          %vm689 = vcmp.ge.f32.partialorder %v681, 1.0
          %vm690 = vcmp.ge.f32.partialorder %v682, 1.0
          %vm691 = vcmp.ge.f32.partialorder %v683, 1.0
          %v692 = vsel %vm684, 1, 0
          %v693 = vsel %vm685, 1, 0
          %v694 = vsel %vm686, 1, 0
          %v695 = vsel %vm687, 1, 0
          %v696 = vsel %vm688, 1, 0
          %v697 = vsel %vm689, 1, 0
          %v698 = vsel %vm690, 1, 0
          %v699 = vsel %vm691, 1, 0
          %v700 = vcvt.s32.f32 %v692
          %v701 = vcvt.s32.f32 %v693
          %v702 = vcvt.s32.f32 %v694
          %v703 = vcvt.s32.f32 %v695
          %v704 = vcvt.s32.f32 %v696
          %v705 = vcvt.s32.f32 %v697
          %v706 = vcvt.s32.f32 %v698
          %v707 = vcvt.s32.f32 %v699
          %v708 = vsub.f32 %v676, %v700
          %v709 = vsub.f32 %v677, %v701
          %v710 = vsub.f32 %v678, %v702
          %v711 = vsub.f32 %v679, %v703
          %v712 = vsub.f32 %v680, %v704
          %v713 = vsub.f32 %v681, %v705
          %v714 = vsub.f32 %v682, %v706
          %v715 = vsub.f32 %v683, %v707
          %v716 = vadd.f32 %v700, 0.0
          %v717 = vadd.f32 %v701, 0.0
          %v718 = vadd.f32 %v702, 0.0
          %v719 = vadd.f32 %v703, 0.0
          %v720 = vadd.f32 %v704, 0.0
          %v721 = vadd.f32 %v705, 0.0
          %v722 = vadd.f32 %v706, 0.0
          %v723 = vadd.f32 %v707, 0.0
          %v724 = vsub.f32 %v660, %v708
          %v725 = vsub.f32 %v661, %v709
          %v726 = vsub.f32 %v662, %v710
          %v727 = vsub.f32 %v663, %v711
          %v728 = vsub.f32 %v664, %v712
          %v729 = vsub.f32 %v665, %v713
          %v730 = vsub.f32 %v666, %v714
          %v731 = vsub.f32 %v667, %v715
          %v732 = vmul.f32 %v724, 0.5
          %v733 = vmul.f32 %v725, 0.5
          %v734 = vmul.f32 %v726, 0.5
          %v735 = vmul.f32 %v727, 0.5
          %v736 = vmul.f32 %v728, 0.5
          %v737 = vmul.f32 %v729, 0.5
          %v738 = vmul.f32 %v730, 0.5
          %v739 = vmul.f32 %v731, 0.5
          %v740 = vadd.f32 %v708, %v732
          %v741 = vadd.f32 %v709, %v733
          %v742 = vadd.f32 %v710, %v734
          %v743 = vadd.f32 %v711, %v735
          %v744 = vadd.f32 %v712, %v736
          %v745 = vadd.f32 %v713, %v737
          %v746 = vadd.f32 %v714, %v738
          %v747 = vadd.f32 %v715, %v739
          %vm748 = vcmp.ge.f32.partialorder %v740, 1.0
          %vm749 = vcmp.ge.f32.partialorder %v741, 1.0
          %vm750 = vcmp.ge.f32.partialorder %v742, 1.0
          %vm751 = vcmp.ge.f32.partialorder %v743, 1.0
          %vm752 = vcmp.ge.f32.partialorder %v744, 1.0
          %vm753 = vcmp.ge.f32.partialorder %v745, 1.0
          %vm754 = vcmp.ge.f32.partialorder %v746, 1.0
          %vm755 = vcmp.ge.f32.partialorder %v747, 1.0
          %v756 = vsel %vm748, 1, 0
          %v757 = vsel %vm749, 1, 0
          %v758 = vsel %vm750, 1, 0
          %v759 = vsel %vm751, 1, 0
          %v760 = vsel %vm752, 1, 0
          %v761 = vsel %vm753, 1, 0
          %v762 = vsel %vm754, 1, 0
          %v763 = vsel %vm755, 1, 0
          %v764 = vcvt.s32.f32 %v756
          %v765 = vcvt.s32.f32 %v757
          %v766 = vcvt.s32.f32 %v758
          %v767 = vcvt.s32.f32 %v759
          %v768 = vcvt.s32.f32 %v760
          %v769 = vcvt.s32.f32 %v761
          %v770 = vcvt.s32.f32 %v762
          %v771 = vcvt.s32.f32 %v763
          %v772 = vsub.f32 %v740, %v764
          %v773 = vsub.f32 %v741, %v765
          %v774 = vsub.f32 %v742, %v766
          %v775 = vsub.f32 %v743, %v767
          %v776 = vsub.f32 %v744, %v768
          %v777 = vsub.f32 %v745, %v769
          %v778 = vsub.f32 %v746, %v770
          %v779 = vsub.f32 %v747, %v771
          %v780 = vadd.f32 %v716, %v764
          %v781 = vadd.f32 %v717, %v765
          %v782 = vadd.f32 %v718, %v766
          %v783 = vadd.f32 %v719, %v767
          %v784 = vadd.f32 %v720, %v768
          %v785 = vadd.f32 %v721, %v769
          %v786 = vadd.f32 %v722, %v770
          %v787 = vadd.f32 %v723, %v771
          %v788 = vsub.f32 %v660, %v772
          %v789 = vsub.f32 %v661, %v773
          %v790 = vsub.f32 %v662, %v774
          %v791 = vsub.f32 %v663, %v775
          %v792 = vsub.f32 %v664, %v776
          %v793 = vsub.f32 %v665, %v777
          %v794 = vsub.f32 %v666, %v778
          %v795 = vsub.f32 %v667, %v779
          %v796 = vmul.f32 %v788, 0.5
          %v797 = vmul.f32 %v789, 0.5
          %v798 = vmul.f32 %v790, 0.5
          %v799 = vmul.f32 %v791, 0.5
          %v800 = vmul.f32 %v792, 0.5
          %v801 = vmul.f32 %v793, 0.5
          %v802 = vmul.f32 %v794, 0.5
          %v803 = vmul.f32 %v795, 0.5
          %v804 = vadd.f32 %v772, %v796
          %v805 = vadd.f32 %v773, %v797
          %v806 = vadd.f32 %v774, %v798
          %v807 = vadd.f32 %v775, %v799
          %v808 = vadd.f32 %v776, %v800
          %v809 = vadd.f32 %v777, %v801
          %v810 = vadd.f32 %v778, %v802
          %v811 = vadd.f32 %v779, %v803
          %vm812 = vcmp.ge.f32.partialorder %v804, 1.0
          %vm813 = vcmp.ge.f32.partialorder %v805, 1.0
          %vm814 = vcmp.ge.f32.partialorder %v806, 1.0
          %vm815 = vcmp.ge.f32.partialorder %v807, 1.0
          %vm816 = vcmp.ge.f32.partialorder %v808, 1.0
          %vm817 = vcmp.ge.f32.partialorder %v809, 1.0
          %vm818 = vcmp.ge.f32.partialorder %v810, 1.0
          %vm819 = vcmp.ge.f32.partialorder %v811, 1.0
          %v820 = vsel %vm812, 1, 0
          %v821 = vsel %vm813, 1, 0
          %v822 = vsel %vm814, 1, 0
          %v823 = vsel %vm815, 1, 0
          %v824 = vsel %vm816, 1, 0
          %v825 = vsel %vm817, 1, 0
          %v826 = vsel %vm818, 1, 0
          %v827 = vsel %vm819, 1, 0
          %v828 = vcvt.s32.f32 %v820
          %v829 = vcvt.s32.f32 %v821
          %v830 = vcvt.s32.f32 %v822
          %v831 = vcvt.s32.f32 %v823
          %v832 = vcvt.s32.f32 %v824
          %v833 = vcvt.s32.f32 %v825
          %v834 = vcvt.s32.f32 %v826
          %v835 = vcvt.s32.f32 %v827
          %v836 = vsub.f32 %v804, %v828
          %v837 = vsub.f32 %v805, %v829
          %v838 = vsub.f32 %v806, %v830
          %v839 = vsub.f32 %v807, %v831
          %v840 = vsub.f32 %v808, %v832
          %v841 = vsub.f32 %v809, %v833
          %v842 = vsub.f32 %v810, %v834
          %v843 = vsub.f32 %v811, %v835
          %v844 = vadd.f32 %v780, %v828
          %v845 = vadd.f32 %v781, %v829
          %v846 = vadd.f32 %v782, %v830
          %v847 = vadd.f32 %v783, %v831
          %v848 = vadd.f32 %v784, %v832
          %v849 = vadd.f32 %v785, %v833
          %v850 = vadd.f32 %v786, %v834
          %v851 = vadd.f32 %v787, %v835
          %v852 = vsub.f32 %v660, %v836
          %v853 = vsub.f32 %v661, %v837
          %v854 = vsub.f32 %v662, %v838
          %v855 = vsub.f32 %v663, %v839
          %v856 = vsub.f32 %v664, %v840
          %v857 = vsub.f32 %v665, %v841
          %v858 = vsub.f32 %v666, %v842
          %v859 = vsub.f32 %v667, %v843
          %v860 = vmul.f32 %v852, 0.5
          %v861 = vmul.f32 %v853, 0.5
          %v862 = vmul.f32 %v854, 0.5
          %v863 = vmul.f32 %v855, 0.5
          %v864 = vmul.f32 %v856, 0.5
          %v865 = vmul.f32 %v857, 0.5
          %v866 = vmul.f32 %v858, 0.5
          %v867 = vmul.f32 %v859, 0.5
          %v868 = vadd.f32 %v836, %v860
          %v869 = vadd.f32 %v837, %v861
          %v870 = vadd.f32 %v838, %v862
          %v871 = vadd.f32 %v839, %v863
          %v872 = vadd.f32 %v840, %v864
          %v873 = vadd.f32 %v841, %v865
          %v874 = vadd.f32 %v842, %v866
          %v875 = vadd.f32 %v843, %v867
          %vm876 = vcmp.ge.f32.partialorder %v868, 1.0
          %vm877 = vcmp.ge.f32.partialorder %v869, 1.0
          %vm878 = vcmp.ge.f32.partialorder %v870, 1.0
          %vm879 = vcmp.ge.f32.partialorder %v871, 1.0
          %vm880 = vcmp.ge.f32.partialorder %v872, 1.0
          %vm881 = vcmp.ge.f32.partialorder %v873, 1.0
          %vm882 = vcmp.ge.f32.partialorder %v874, 1.0
          %vm883 = vcmp.ge.f32.partialorder %v875, 1.0
          %v884 = vsel %vm876, 1, 0
          %v885 = vsel %vm877, 1, 0
          %v886 = vsel %vm878, 1, 0
          %v887 = vsel %vm879, 1, 0
          %v888 = vsel %vm880, 1, 0
          %v889 = vsel %vm881, 1, 0
          %v890 = vsel %vm882, 1, 0
          %v891 = vsel %vm883, 1, 0
          %v892 = vcvt.s32.f32 %v884
          %v893 = vcvt.s32.f32 %v885
          %v894 = vcvt.s32.f32 %v886
          %v895 = vcvt.s32.f32 %v887
          %v896 = vcvt.s32.f32 %v888
          %v897 = vcvt.s32.f32 %v889
          %v898 = vcvt.s32.f32 %v890
          %v899 = vcvt.s32.f32 %v891
          %v900 = vadd.f32 %v844, %v892
          %v901 = vadd.f32 %v845, %v893
          %v902 = vadd.f32 %v846, %v894
          %v903 = vadd.f32 %v847, %v895
          %v904 = vadd.f32 %v848, %v896
          %v905 = vadd.f32 %v849, %v897
          %v906 = vadd.f32 %v850, %v898
          %v907 = vadd.f32 %v851, %v899
          %v908 = vmul.f32 %v900, 0.25
          %v909 = vmul.f32 %v901, 0.25
          %v910 = vmul.f32 %v902, 0.25
          %v911 = vmul.f32 %v903, 0.25
          %v912 = vmul.f32 %v904, 0.25
          %v913 = vmul.f32 %v905, 0.25
          %v914 = vmul.f32 %v906, 0.25
          %v915 = vmul.f32 %v907, 0.25
          %v917 = vsel %vm534, %v908, 0
          %v920 = vsel %vm534, %v909, 0
          %v923 = vsel %vm534, %v910, 0
          %v926 = vsel %vm534, %v911, 0
          %v929 = vsel %vm534, %v912, 0
          %v932 = vsel %vm534, %v913, 0
          %v935 = vsel %vm534, %v914, 0
          %v938 = vsel %vm534, %v915, 0
          %940 = vmatprep.subr.mxu0 %v458
          %941 = vmatpush1.msra.mxu0 %v457
          %942 = vmatprep.subr.mxu0 %v461
          %943 = vmatpush1.msra.mxu0 %v460
          %944 = vmatprep.subr.mxu0 %v464
          %945 = vmatpush1.msra.mxu0 %v463
          %946 = vmatprep.subr.mxu0 %v467
          %947 = vmatpush1.msra.mxu0 %v466
          %948 = vmatprep.subr.mxu0 0.0
          %949 = vmatpush1.msra.mxu0 0.0
          %950 = vmatprep.subr.mxu0 0.0
          %951 = vmatpush1.msra.mxu0 0.0
          %952 = vmatprep.subr.mxu0 0.0
          %953 = vmatpush1.msra.mxu0 0.0
          %954 = vmatprep.subr.mxu0 0.0
          %955 = vmatpush1.msra.mxu0 0.0
          %956 = vmatprep.subr.mxu0 0.0
          %957 = vmatpush1.msra.mxu0 0.0
          %958 = vmatprep.subr.mxu0 0.0
          %959 = vmatpush1.msra.mxu0 0.0
          %960 = vmatprep.subr.mxu0 0.0
          %961 = vmatpush1.msra.mxu0 0.0
          %962 = vmatprep.subr.mxu0 0.0
          %963 = vmatpush1.msra.mxu0 0.0
          %964 = vmatprep.subr.mxu0 0.0
          %965 = vmatpush1.msra.mxu0 0.0
          %966 = vmatprep.subr.mxu0 0.0
          %967 = vmatpush1.msra.mxu0 0.0
          %968 = vmatprep.subr.mxu0 0.0
          %969 = vmatpush1.msra.mxu0 0.0
          %970 = vmatprep.subr.mxu0 0.0
          %971 = vmatpush1.msra.mxu0 0.0
          %972 = vmatprep.subr.mxu0 0.0
          %973 = vmatpush1.msra.mxu0 0.0
          %974 = vmatprep.subr.mxu0 0.0
          %975 = vmatpush1.msra.mxu0 0.0
          %976 = vmatprep.subr.mxu0 0.0
          %977 = vmatpush1.msra.mxu0 0.0
          %978 = vmatprep.subr.mxu0 0.0
          %979 = vmatpush1.msra.mxu0 0.0
          %980 = vmatprep.subr.mxu0 0.0
          %981 = vmatpush1.msra.mxu0 0.0
          %982 = vmatprep.subr.mxu0 0.0
          %983 = vmatpush1.msra.mxu0 0.0
          %984 = vmatprep.subr.mxu0 0.0
          %985 = vmatpush1.msra.mxu0 0.0
          %986 = vmatprep.subr.mxu0 0.0
          %987 = vmatpush1.msra.mxu0 0.0
          %988 = vmatprep.subr.mxu0 0.0
          %989 = vmatpush1.msra.mxu0 0.0
          %990 = vmatprep.subr.mxu0 0.0
          %991 = vmatpush1.msra.mxu0 0.0
          %992 = vmatprep.subr.mxu0 0.0
          %993 = vmatpush1.msra.mxu0 0.0
          %994 = vmatprep.subr.mxu0 0.0
          %995 = vmatpush1.msra.mxu0 0.0
          %996 = vmatprep.subr.mxu0 0.0
          %997 = vmatpush1.msra.mxu0 0.0
          %998 = vmatprep.subr.mxu0 0.0
          %999 = vmatpush1.msra.mxu0 0.0
          %1000 = vmatprep.subr.mxu0 0.0
          %1001 = vmatpush1.msra.mxu0 0.0
          %1002 = vmatprep.subr.mxu0 0.0
          %1003 = vmatpush1.msra.mxu0 0.0
          %1004 = vmatprep.mubr.f32.mxu0 0.0
          %1005 = vmatmul.mubr.f32.gmra.mrb[0].mxu0 %v917
          %v1006 = vpop.f32.mrb[0].mxu0
          %v1007 = vadd.f32 0.0, %v1006
          %v1008 = vpop.f32.mrb[0].mxu0
          %v1009 = vadd.f32 0.0, %v1008
          %1010 = vmatprep.mubr.f32.mxu0 0.0
          %1011 = vmatmul.mubr.f32.gmra.mrb[0].mxu0 %v920
          %v1012 = vpop.f32.mrb[0].mxu0
          %v1013 = vadd.f32 0.0, %v1012
          %v1014 = vpop.f32.mrb[0].mxu0
          %v1015 = vadd.f32 0.0, %v1014
          %1016 = vmatprep.mubr.f32.mxu0 0.0
          %1017 = vmatmul.mubr.f32.gmra.mrb[0].mxu0 %v923
          %v1018 = vpop.f32.mrb[0].mxu0
          %v1019 = vadd.f32 0.0, %v1018
          %v1020 = vpop.f32.mrb[0].mxu0
          %v1021 = vadd.f32 0.0, %v1020
          %1022 = vmatprep.mubr.f32.mxu0 0.0
          %1023 = vmatmul.mubr.f32.gmra.mrb[0].mxu0 %v926
          %v1024 = vpop.f32.mrb[0].mxu0
          %v1025 = vadd.f32 0.0, %v1024
          %v1026 = vpop.f32.mrb[0].mxu0
          %v1027 = vadd.f32 0.0, %v1026
          %1028 = vmatprep.mubr.f32.mxu0 0.0
          %1029 = vmatmul.mubr.f32.gmra.mrb[0].mxu0 %v929
          %v1030 = vpop.f32.mrb[0].mxu0
          %v1031 = vadd.f32 0.0, %v1030
          %v1032 = vpop.f32.mrb[0].mxu0
          %v1033 = vadd.f32 0.0, %v1032
          %1034 = vmatprep.mubr.f32.mxu0 0.0
          %1035 = vmatmul.mubr.f32.gmra.mrb[0].mxu0 %v932
          %v1036 = vpop.f32.mrb[0].mxu0
          %v1037 = vadd.f32 0.0, %v1036
          %v1038 = vpop.f32.mrb[0].mxu0
          %v1039 = vadd.f32 0.0, %v1038
          %1040 = vmatprep.mubr.f32.mxu0 0.0
          %1041 = vmatmul.mubr.f32.gmra.mrb[0].mxu0 %v935
          %v1042 = vpop.f32.mrb[0].mxu0
          %v1043 = vadd.f32 0.0, %v1042
          %v1044 = vpop.f32.mrb[0].mxu0
          %v1045 = vadd.f32 0.0, %v1044
          %1046 = vmatprep.mubr.f32.mxu0 0.0
          %1047 = vmatmul.mubr.f32.gmra.mrb[0].mxu0 %v938
          %v1048 = vpop.f32.mrb[0].mxu0
          %v1049 = vadd.f32 0.0, %v1048
          %v1050 = vpop.f32.mrb[0].mxu0
          %v1051 = vadd.f32 0.0, %v1050
          %1052 = vdwg.mxu0
          %1053 = vmatprep.subr.mxu0 0.0
          %1054 = vmatpush1.msra.mxu0 %v459
          %1055 = vmatprep.subr.mxu0 0.0
          %1056 = vmatpush1.msra.mxu0 %v462
          %1057 = vmatprep.subr.mxu0 0.0
          %1058 = vmatpush1.msra.mxu0 %v465
          %1059 = vmatprep.subr.mxu0 0.0
          %1060 = vmatpush1.msra.mxu0 %v468
          %1061 = vmatprep.subr.mxu0 0.0
          %1062 = vmatpush1.msra.mxu0 0.0
          %1063 = vmatprep.subr.mxu0 0.0
          %1064 = vmatpush1.msra.mxu0 0.0
          %1065 = vmatprep.subr.mxu0 0.0
          %1066 = vmatpush1.msra.mxu0 0.0
          %1067 = vmatprep.subr.mxu0 0.0
          %1068 = vmatpush1.msra.mxu0 0.0
          %1069 = vmatprep.subr.mxu0 0.0
          %1070 = vmatpush1.msra.mxu0 0.0
          %1071 = vmatprep.subr.mxu0 0.0
          %1072 = vmatpush1.msra.mxu0 0.0
          %1073 = vmatprep.subr.mxu0 0.0
          %1074 = vmatpush1.msra.mxu0 0.0
          %1075 = vmatprep.subr.mxu0 0.0
          %1076 = vmatpush1.msra.mxu0 0.0
          %1077 = vmatprep.subr.mxu0 0.0
          %1078 = vmatpush1.msra.mxu0 0.0
          %1079 = vmatprep.subr.mxu0 0.0
          %1080 = vmatpush1.msra.mxu0 0.0
          %1081 = vmatprep.subr.mxu0 0.0
          %1082 = vmatpush1.msra.mxu0 0.0
          %1083 = vmatprep.subr.mxu0 0.0
          %1084 = vmatpush1.msra.mxu0 0.0
          %1085 = vmatprep.subr.mxu0 0.0
          %1086 = vmatpush1.msra.mxu0 0.0
          %1087 = vmatprep.subr.mxu0 0.0
          %1088 = vmatpush1.msra.mxu0 0.0
          %1089 = vmatprep.subr.mxu0 0.0
          %1090 = vmatpush1.msra.mxu0 0.0
          %1091 = vmatprep.subr.mxu0 0.0
          %1092 = vmatpush1.msra.mxu0 0.0
          %1093 = vmatprep.subr.mxu0 0.0
          %1094 = vmatpush1.msra.mxu0 0.0
          %1095 = vmatprep.subr.mxu0 0.0
          %1096 = vmatpush1.msra.mxu0 0.0
          %1097 = vmatprep.subr.mxu0 0.0
          %1098 = vmatpush1.msra.mxu0 0.0
          %1099 = vmatprep.subr.mxu0 0.0
          %1100 = vmatpush1.msra.mxu0 0.0
          %1101 = vmatprep.subr.mxu0 0.0
          %1102 = vmatpush1.msra.mxu0 0.0
          %1103 = vmatprep.subr.mxu0 0.0
          %1104 = vmatpush1.msra.mxu0 0.0
          %1105 = vmatprep.subr.mxu0 0.0
          %1106 = vmatpush1.msra.mxu0 0.0
          %1107 = vmatprep.subr.mxu0 0.0
          %1108 = vmatpush1.msra.mxu0 0.0
          %1109 = vmatprep.subr.mxu0 0.0
          %1110 = vmatpush1.msra.mxu0 0.0
          %1111 = vmatprep.subr.mxu0 0.0
          %1112 = vmatpush1.msra.mxu0 0.0
          %1113 = vmatprep.subr.mxu0 0.0
          %1114 = vmatpush1.msra.mxu0 0.0
          %1115 = vmatprep.subr.mxu0 0.0
          %1116 = vmatpush1.msra.mxu0 0.0
          %1117 = vmatprep.mubr.f32.mxu0 0.0
          %1118 = vmatmul.mubr.f32.gmra.mrb[0].mxu0 %v917
          %v1119 = vpop.f32.mrb[0].mxu0
          %v1120 = vadd.f32 0.0, %v1119
          %v1121 = vpop.f32.mrb[0].mxu0
          %1122 = vmatprep.mubr.f32.mxu0 0.0
          %1123 = vmatmul.mubr.f32.gmra.mrb[0].mxu0 %v920
          %v1124 = vpop.f32.mrb[0].mxu0
          %v1125 = vadd.f32 0.0, %v1124
          %v1126 = vpop.f32.mrb[0].mxu0
          %1127 = vmatprep.mubr.f32.mxu0 0.0
          %1128 = vmatmul.mubr.f32.gmra.mrb[0].mxu0 %v923
          %v1129 = vpop.f32.mrb[0].mxu0
          %v1130 = vadd.f32 0.0, %v1129
          %v1131 = vpop.f32.mrb[0].mxu0
          %1132 = vmatprep.mubr.f32.mxu0 0.0
          %1133 = vmatmul.mubr.f32.gmra.mrb[0].mxu0 %v926
          %v1134 = vpop.f32.mrb[0].mxu0
          %v1135 = vadd.f32 0.0, %v1134
          %v1136 = vpop.f32.mrb[0].mxu0
          %1137 = vmatprep.mubr.f32.mxu0 0.0
          %1138 = vmatmul.mubr.f32.gmra.mrb[0].mxu0 %v929
          %v1139 = vpop.f32.mrb[0].mxu0
          %v1140 = vadd.f32 0.0, %v1139
          %v1141 = vpop.f32.mrb[0].mxu0
          %1142 = vmatprep.mubr.f32.mxu0 0.0
          %1143 = vmatmul.mubr.f32.gmra.mrb[0].mxu0 %v932
          %v1144 = vpop.f32.mrb[0].mxu0
          %v1145 = vadd.f32 0.0, %v1144
          %v1146 = vpop.f32.mrb[0].mxu0
          %1147 = vmatprep.mubr.f32.mxu0 0.0
          %1148 = vmatmul.mubr.f32.gmra.mrb[0].mxu0 %v935
          %v1149 = vpop.f32.mrb[0].mxu0
          %v1150 = vadd.f32 0.0, %v1149
          %v1151 = vpop.f32.mrb[0].mxu0
          %1152 = vmatprep.mubr.f32.mxu0 0.0
          %1153 = vmatmul.mubr.f32.gmra.mrb[0].mxu0 %v938
          %v1154 = vpop.f32.mrb[0].mxu0
          %v1155 = vadd.f32 0.0, %v1154
          %v1156 = vpop.f32.mrb[0].mxu0
          %1157 = vdwg.mxu0
          %s1158 = smul.u32 %s510, 64
          %s1159 = sshra.s32 %s1158, 3
          %s1160 = sand.u32 %s1158, 7
          %s1161 = smul.u32 %s1159, 3
          %s1162 = smul.addr %s1161, 8
          %s1163 = scalar_lea.vmem [#allocation2], %s1162
          %1164 = vst [vmem:[%s1163] sm:$0xff] %v1007
          %1165 = vst [vmem:[%s1163 + $0x8] sm:$0xff] %v1009
          %1166 = vst [vmem:[%s1163 + $0x10] sm:$0xff] %v1120
          %1167 = vst [vmem:[%s1163 + $0x18] sm:$0xff] %v1013
          %1168 = vst [vmem:[%s1163 + $0x20] sm:$0xff] %v1015
          %1169 = vst [vmem:[%s1163 + $0x28] sm:$0xff] %v1125
          %1170 = vst [vmem:[%s1163 + $0x30] sm:$0xff] %v1019
          %1171 = vst [vmem:[%s1163 + $0x38] sm:$0xff] %v1021
          %1172 = vst [vmem:[%s1163 + $0x40] sm:$0xff] %v1130
          %1173 = vst [vmem:[%s1163 + $0x48] sm:$0xff] %v1025
          %1174 = vst [vmem:[%s1163 + $0x50] sm:$0xff] %v1027
          %1175 = vst [vmem:[%s1163 + $0x58] sm:$0xff] %v1135
          %1176 = vst [vmem:[%s1163 + $0x60] sm:$0xff] %v1031
          %1177 = vst [vmem:[%s1163 + $0x68] sm:$0xff] %v1033
          %1178 = vst [vmem:[%s1163 + $0x70] sm:$0xff] %v1140
          %1179 = vst [vmem:[%s1163 + $0x78] sm:$0xff] %v1037
          %1180 = vst [vmem:[%s1163 + $0x80] sm:$0xff] %v1039
          %1181 = vst [vmem:[%s1163 + $0x88] sm:$0xff] %v1145
          %1182 = vst [vmem:[%s1163 + $0x90] sm:$0xff] %v1043
          %1183 = vst [vmem:[%s1163 + $0x98] sm:$0xff] %v1045
          %1184 = vst [vmem:[%s1163 + $0xa0] sm:$0xff] %v1150
          %1185 = vst [vmem:[%s1163 + $0xa8] sm:$0xff] %v1049
          %1186 = vst [vmem:[%s1163 + $0xb0] sm:$0xff] %v1051
          %1187 = vst [vmem:[%s1163 + $0xb8] sm:$0xff] %v1155
        $region110: #{tpu_custom_call.1} parent=92 // loop_footer
          %s512 = sadd.s32 %s510, 1
        $region111: #{tpu_custom_call.1} parent=92 // loop_footer_branch
          %509 = sbr.rel target = $region107
        $region112: #{tpu_custom_call.1} parent=92 // loop_exit
          _
        %v1188 = vld [vmem:[%s453] sm:$0xff]
        %v1189 = vsub.s32 %v1188, 1
        %s1190 = sadd.s32 %s501, 1
        %p1191 = scmp.lt.s32.totalorder %s1190, 0
        %s1192 = ssub.s32 0, %s1190
        %s1193 = scalar_select %p1191, %s1192, %s1190
        %s1194 = sshrl.u32 %s1193, 1
        %s1195 = ssub.s32 0, %s1194
        %s1196 = scalar_select %p1191, %s1195, %s1194
        // While loop
        $region113: #{tpu_custom_call.1} parent=92 // loop_pre_header
          _
        $region114: #{tpu_custom_call.1} parent=92 // loop_header
          %s1198 = sphi 0, %s1200
          %p1199 = scmp.ge.s32.totalorder %s1198, %s1196
          %v1203 = vphi 0.0, %v1560
          %v1204 = vphi 0.0, %v1568
        $region115: #{tpu_custom_call.1} parent=92 // loop_header_branch
          %1202 = sbr.rel (%p1199) target = $region119
        $region116: #{tpu_custom_call.1} parent=92 // loop_body
          %s1205 = smul.u32 %s1198, 2
          %s1206 = smul.u32 %s1198, 16
          %s1207 = sshra.s32 %s1206, 3
          %s1208 = sand.u32 %s1206, 7
          %s1209 = smul.u32 %s1207, 3
          %s1210 = smul.addr %s1209, 8
          %s1211 = scalar_lea.vmem [#allocation2], %s1210
          %v1212 = vld [vmem:[%s1211] sm:$0xff]
          %v1213 = vld [vmem:[%s1211 + $0x8] sm:$0xff]
          %v1214 = vld [vmem:[%s1211 + $0x10] sm:$0xff]
          %v1215 = vpack.c.bf16 %v1203, %v1203
          %v1232 = vunpack.c.l.b16 %v469
          %v1233 = vunpack.c.h.b16 %v469
          %v1234 = vunpack.c.l.b16 %v470
          %v1235 = vunpack.c.h.b16 %v470
          %v1236 = vunpack.c.l.b16 %v471
          %v1237 = vunpack.c.h.b16 %v471
          %v1238 = vunpack.c.l.b16 %v472
          %v1239 = vunpack.c.h.b16 %v472
          %v1240 = vunpack.c.l.b16 %v473
          %v1241 = vunpack.c.h.b16 %v473
          %v1242 = vunpack.c.l.b16 %v474
          %v1243 = vunpack.c.h.b16 %v474
          %v1244 = vunpack.c.l.b16 %v475
          %v1245 = vunpack.c.h.b16 %v475
          %v1246 = vunpack.c.l.b16 %v476
          %v1247 = vunpack.c.h.b16 %v476
          %v1248 = vunpack.c.l.b16 %v477
          %v1249 = vunpack.c.h.b16 %v477
          %v1250 = vunpack.c.l.b16 %v478
          %v1251 = vunpack.c.h.b16 %v478
          %v1252 = vunpack.c.l.b16 %v479
          %v1253 = vunpack.c.h.b16 %v479
          %v1254 = vunpack.c.l.b16 %v480
          %v1255 = vunpack.c.h.b16 %v480
          %v1256 = vunpack.c.l.b16 %v481
          %v1257 = vunpack.c.h.b16 %v481
          %v1258 = vunpack.c.l.b16 %v482
          %v1259 = vunpack.c.h.b16 %v482
          %v1260 = vunpack.c.l.b16 %v483
          %v1261 = vunpack.c.h.b16 %v483
          %v1262 = vunpack.c.l.b16 %v484
          %v1263 = vunpack.c.h.b16 %v484
          %v1264 = vpack.c.b16 %v1234, %v1232
          %v1265 = vpack.c.b16 %v1235, %v1233
          %v1266 = vpack.c.b16 %v1238, %v1236
          %v1267 = vpack.c.b16 %v1239, %v1237
          %v1268 = vpack.c.b16 %v1242, %v1240
          %v1269 = vpack.c.b16 %v1243, %v1241
          %v1270 = vpack.c.b16 %v1246, %v1244
          %v1271 = vpack.c.b16 %v1247, %v1245
          %v1272 = vpack.c.b16 %v1250, %v1248
          %v1273 = vpack.c.b16 %v1251, %v1249
          %v1274 = vpack.c.b16 %v1254, %v1252
          %v1275 = vpack.c.b16 %v1255, %v1253
          %v1276 = vpack.c.b16 %v1258, %v1256
          %v1277 = vpack.c.b16 %v1259, %v1257
          %v1278 = vpack.c.b16 %v1262, %v1260
          %v1279 = vpack.c.b16 %v1263, %v1261
          %1296 = vmatprep.subr.bf16.mxu0 %v1265
          %1297 = vmatpush1.bf16.msra.mxu0 %v1264
          %1298 = vmatprep.subr.bf16.mxu0 %v1267
          %1299 = vmatpush1.bf16.msra.mxu0 %v1266
          %1300 = vmatprep.subr.bf16.mxu0 %v1269
          %1301 = vmatpush1.bf16.msra.mxu0 %v1268
          %1302 = vmatprep.subr.bf16.mxu0 %v1271
          %1303 = vmatpush1.bf16.msra.mxu0 %v1270
          %1304 = vmatprep.subr.bf16.mxu0 %v1273
          %1305 = vmatpush1.bf16.msra.mxu0 %v1272
          %1306 = vmatprep.subr.bf16.mxu0 %v1275
          %1307 = vmatpush1.bf16.msra.mxu0 %v1274
          %1308 = vmatprep.subr.bf16.mxu0 %v1277
          %1309 = vmatpush1.bf16.msra.mxu0 %v1276
          %1310 = vmatprep.subr.bf16.mxu0 %v1279
          %1311 = vmatpush1.bf16.msra.mxu0 %v1278
          %1312 = vmatprep.subr.bf16.mxu0 0
          %1313 = vmatpush1.bf16.msra.mxu0 0
          %1314 = vmatprep.subr.bf16.mxu0 0
          %1315 = vmatpush1.bf16.msra.mxu0 0
          %1316 = vmatprep.subr.bf16.mxu0 0
          %1317 = vmatpush1.bf16.msra.mxu0 0
          %1318 = vmatprep.subr.bf16.mxu0 0
          %1319 = vmatpush1.bf16.msra.mxu0 0
          %1320 = vmatprep.subr.bf16.mxu0 0
          %1321 = vmatpush1.bf16.msra.mxu0 0
          %1322 = vmatprep.subr.bf16.mxu0 0
          %1323 = vmatpush1.bf16.msra.mxu0 0
          %1324 = vmatprep.subr.bf16.mxu0 0
          %1325 = vmatpush1.bf16.msra.mxu0 0
          %1326 = vmatprep.subr.bf16.mxu0 0
          %1327 = vmatpush1.bf16.msra.mxu0 0
          %1328 = vmatprep.mubr.bf16.mxu0 0
          %1329 = vmatmul.mubr.bf16.gmra.mrb[0].mxu0 %v1215
          %v1330 = vpop.f32.mrb[0].mxu0
          %v1331 = vadd.f32 0.0, %v1330
          %v1332 = vpop.f32.mrb[0].mxu0
          %v1333 = vadd.f32 0.0, %v1332
          %v1334 = vpop.f32.mrb[0].mxu0
          %v1335 = vpop.f32.mrb[0].mxu0
          %1336 = vdwg.mxu0
          %v1337 = vadd.f32 %v1212, %v1331
          %v1338 = vadd.f32 %v1213, %v1333
          %vm1339 = vcmp.ge.f32.partialorder %v1337, 0.0
          %v1340 = vsel %vm1339, 1, 0
          %v1341 = vcvt.s32.f32 %v1340
          %vm1342 = vcmp.ge.f32.partialorder %v1338, 0.0
          %v1343 = vsel %vm1342, 1, 0
          %v1344 = vcvt.s32.f32 %v1343
          %v1345 = vmul.f32 %v1341, %v1203
          %v1346 = vpack.c.bf16 %v1345, %v1345
          %v1363 = vunpack.c.l.b16 %v485
          %v1364 = vunpack.c.l.b16 %v486
          %v1365 = vunpack.c.l.b16 %v487
          %v1366 = vunpack.c.l.b16 %v488
          %v1367 = vunpack.c.l.b16 %v489
          %v1368 = vunpack.c.l.b16 %v490
          %v1369 = vunpack.c.l.b16 %v491
          %v1370 = vunpack.c.l.b16 %v492
          %v1371 = vunpack.c.l.b16 %v493
          %v1372 = vunpack.c.l.b16 %v494
          %v1373 = vunpack.c.l.b16 %v495
          %v1374 = vunpack.c.l.b16 %v496
          %v1375 = vunpack.c.l.b16 %v497
          %v1376 = vunpack.c.l.b16 %v498
          %v1377 = vunpack.c.l.b16 %v499
          %v1378 = vunpack.c.l.b16 %v500
          %v1379 = vpack.c.b16 %v1364, %v1363
          %v1380 = vpack.c.b16 %v1366, %v1365
          %v1381 = vpack.c.b16 %v1368, %v1367
          %v1382 = vpack.c.b16 %v1370, %v1369
          %v1383 = vpack.c.b16 %v1372, %v1371
          %v1384 = vpack.c.b16 %v1374, %v1373
          %v1385 = vpack.c.b16 %v1376, %v1375
          %v1386 = vpack.c.b16 %v1378, %v1377
          %1395 = vmatprep.subr.bf16.mxu0 0
          %1396 = vmatpush1.bf16.msra.mxu0 %v1379
          %1397 = vmatprep.subr.bf16.mxu0 0
          %1398 = vmatpush1.bf16.msra.mxu0 %v1380
          %1399 = vmatprep.subr.bf16.mxu0 0
          %1400 = vmatpush1.bf16.msra.mxu0 %v1381
          %1401 = vmatprep.subr.bf16.mxu0 0
          %1402 = vmatpush1.bf16.msra.mxu0 %v1382
          %1403 = vmatprep.subr.bf16.mxu0 0
          %1404 = vmatpush1.bf16.msra.mxu0 %v1383
          %1405 = vmatprep.subr.bf16.mxu0 0
          %1406 = vmatpush1.bf16.msra.mxu0 %v1384
          %1407 = vmatprep.subr.bf16.mxu0 0
          %1408 = vmatpush1.bf16.msra.mxu0 %v1385
          %1409 = vmatprep.subr.bf16.mxu0 0
          %1410 = vmatpush1.bf16.msra.mxu0 %v1386
          %1411 = vmatprep.subr.bf16.mxu0 0
          %1412 = vmatpush1.bf16.msra.mxu0 0
          %1413 = vmatprep.subr.bf16.mxu0 0
          %1414 = vmatpush1.bf16.msra.mxu0 0
          %1415 = vmatprep.subr.bf16.mxu0 0
          %1416 = vmatpush1.bf16.msra.mxu0 0
          %1417 = vmatprep.subr.bf16.mxu0 0
          %1418 = vmatpush1.bf16.msra.mxu0 0
          %1419 = vmatprep.subr.bf16.mxu0 0
          %1420 = vmatpush1.bf16.msra.mxu0 0
          %1421 = vmatprep.subr.bf16.mxu0 0
          %1422 = vmatpush1.bf16.msra.mxu0 0
          %1423 = vmatprep.subr.bf16.mxu0 0
          %1424 = vmatpush1.bf16.msra.mxu0 0
          %1425 = vmatprep.subr.bf16.mxu0 0
          %1426 = vmatpush1.bf16.msra.mxu0 0
          %1427 = vmatprep.mubr.bf16.mxu0 0
          %1428 = vmatmul.mubr.bf16.gmra.mrb[0].mxu0 %v1346
          %v1429 = vpop.f32.mrb[0].mxu0
          %v1430 = vadd.f32 0.0, %v1429
          %v1431 = vpop.f32.mrb[0].mxu0
          %v1432 = vpop.f32.mrb[0].mxu0
          %v1433 = vpop.f32.mrb[0].mxu0
          %1434 = vdwg.mxu0
          %v1435 = vadd.f32 %v1214, %v1430
          %vm1436 = vcmp.ge.f32.partialorder %v1435, 0.0
          %v1437 = vsel %vm1436, 1, 0
          %v1438 = vcvt.s32.f32 %v1437
          %v1439 = vmul.f32 %v1344, %v1203
          %v1440 = vsub.f32 1.0, %v1344
          %v1441 = vmul.f32 %v1440, %v1438
          %v1442 = vadd.f32 %v1439, %v1441
          %v1443 = vstv %s1205
          %vm1444 = vcmp.eq.s32.totalorder %v1189, %v1443
          %v1445 = vsel %vm1444, 1, 0
          %1446 = vset.pattern.permute.xlu0 0
          %1447 = vperm.xlu0 %1446, %v1445
          %v1448 = vpop.permute.xlu0 %1447
          %vm1449 = vcmp.eq.s32.totalorder %v1448, 1
          %v1450 = vsel %vm1449, %v1442, %v1204
          %s1451 = sadd.s32 %s1205, 1
          %s1452 = smul.u32 %s1451, 8
          %s1453 = sshra.s32 %s1452, 3
          %s1454 = sand.u32 %s1452, 7
          %s1455 = smul.u32 %s1453, 3
          %s1456 = smul.addr %s1455, 8
          %s1457 = scalar_lea.vmem [#allocation2], %s1456
          %v1458 = vld [vmem:[%s1457] sm:$0xff]
          %v1459 = vld [vmem:[%s1457 + $0x8] sm:$0xff]
          %v1460 = vld [vmem:[%s1457 + $0x10] sm:$0xff]
          %v1461 = vpack.c.bf16 %v1442, %v1442
          %1462 = vmatprep.subr.bf16.mxu0 %v1265
          %1463 = vmatpush1.bf16.msra.mxu0 %v1264
          %1464 = vmatprep.subr.bf16.mxu0 %v1267
          %1465 = vmatpush1.bf16.msra.mxu0 %v1266
          %1466 = vmatprep.subr.bf16.mxu0 %v1269
          %1467 = vmatpush1.bf16.msra.mxu0 %v1268
          %1468 = vmatprep.subr.bf16.mxu0 %v1271
          %1469 = vmatpush1.bf16.msra.mxu0 %v1270
          %1470 = vmatprep.subr.bf16.mxu0 %v1273
          %1471 = vmatpush1.bf16.msra.mxu0 %v1272
          %1472 = vmatprep.subr.bf16.mxu0 %v1275
          %1473 = vmatpush1.bf16.msra.mxu0 %v1274
          %1474 = vmatprep.subr.bf16.mxu0 %v1277
          %1475 = vmatpush1.bf16.msra.mxu0 %v1276
          %1476 = vmatprep.subr.bf16.mxu0 %v1279
          %1477 = vmatpush1.bf16.msra.mxu0 %v1278
          %1478 = vmatprep.subr.bf16.mxu0 0
          %1479 = vmatpush1.bf16.msra.mxu0 0
          %1480 = vmatprep.subr.bf16.mxu0 0
          %1481 = vmatpush1.bf16.msra.mxu0 0
          %1482 = vmatprep.subr.bf16.mxu0 0
          %1483 = vmatpush1.bf16.msra.mxu0 0
          %1484 = vmatprep.subr.bf16.mxu0 0
          %1485 = vmatpush1.bf16.msra.mxu0 0
          %1486 = vmatprep.subr.bf16.mxu0 0
          %1487 = vmatpush1.bf16.msra.mxu0 0
          %1488 = vmatprep.subr.bf16.mxu0 0
          %1489 = vmatpush1.bf16.msra.mxu0 0
          %1490 = vmatprep.subr.bf16.mxu0 0
          %1491 = vmatpush1.bf16.msra.mxu0 0
          %1492 = vmatprep.subr.bf16.mxu0 0
          %1493 = vmatpush1.bf16.msra.mxu0 0
          %1494 = vmatprep.mubr.bf16.mxu0 0
          %1495 = vmatmul.mubr.bf16.gmra.mrb[0].mxu0 %v1461
          %v1496 = vpop.f32.mrb[0].mxu0
          %v1497 = vadd.f32 0.0, %v1496
          %v1498 = vpop.f32.mrb[0].mxu0
          %v1499 = vadd.f32 0.0, %v1498
          %v1500 = vpop.f32.mrb[0].mxu0
          %v1501 = vpop.f32.mrb[0].mxu0
          %1502 = vdwg.mxu0
          %v1503 = vadd.f32 %v1458, %v1497
          %v1504 = vadd.f32 %v1459, %v1499
          %vm1505 = vcmp.ge.f32.partialorder %v1503, 0.0
          %v1506 = vsel %vm1505, 1, 0
          %v1507 = vcvt.s32.f32 %v1506
          %vm1508 = vcmp.ge.f32.partialorder %v1504, 0.0
          %v1509 = vsel %vm1508, 1, 0
          %v1510 = vcvt.s32.f32 %v1509
          %v1511 = vmul.f32 %v1507, %v1442
          %v1512 = vpack.c.bf16 %v1511, %v1511
          %1513 = vmatprep.subr.bf16.mxu0 0
          %1514 = vmatpush1.bf16.msra.mxu0 %v1379
          %1515 = vmatprep.subr.bf16.mxu0 0
          %1516 = vmatpush1.bf16.msra.mxu0 %v1380
          %1517 = vmatprep.subr.bf16.mxu0 0
          %1518 = vmatpush1.bf16.msra.mxu0 %v1381
          %1519 = vmatprep.subr.bf16.mxu0 0
          %1520 = vmatpush1.bf16.msra.mxu0 %v1382
          %1521 = vmatprep.subr.bf16.mxu0 0
          %1522 = vmatpush1.bf16.msra.mxu0 %v1383
          %1523 = vmatprep.subr.bf16.mxu0 0
          %1524 = vmatpush1.bf16.msra.mxu0 %v1384
          %1525 = vmatprep.subr.bf16.mxu0 0
          %1526 = vmatpush1.bf16.msra.mxu0 %v1385
          %1527 = vmatprep.subr.bf16.mxu0 0
          %1528 = vmatpush1.bf16.msra.mxu0 %v1386
          %1529 = vmatprep.subr.bf16.mxu0 0
          %1530 = vmatpush1.bf16.msra.mxu0 0
          %1531 = vmatprep.subr.bf16.mxu0 0
          %1532 = vmatpush1.bf16.msra.mxu0 0
          %1533 = vmatprep.subr.bf16.mxu0 0
          %1534 = vmatpush1.bf16.msra.mxu0 0
          %1535 = vmatprep.subr.bf16.mxu0 0
          %1536 = vmatpush1.bf16.msra.mxu0 0
          %1537 = vmatprep.subr.bf16.mxu0 0
          %1538 = vmatpush1.bf16.msra.mxu0 0
          %1539 = vmatprep.subr.bf16.mxu0 0
          %1540 = vmatpush1.bf16.msra.mxu0 0
          %1541 = vmatprep.subr.bf16.mxu0 0
          %1542 = vmatpush1.bf16.msra.mxu0 0
          %1543 = vmatprep.subr.bf16.mxu0 0
          %1544 = vmatpush1.bf16.msra.mxu0 0
          %1545 = vmatprep.mubr.bf16.mxu0 0
          %1546 = vmatmul.mubr.bf16.gmra.mrb[0].mxu0 %v1512
          %v1547 = vpop.f32.mrb[0].mxu0
          %v1548 = vadd.f32 0.0, %v1547
          %v1549 = vpop.f32.mrb[0].mxu0
          %v1550 = vpop.f32.mrb[0].mxu0
          %v1551 = vpop.f32.mrb[0].mxu0
          %1552 = vdwg.mxu0
          %v1553 = vadd.f32 %v1460, %v1548
          %vm1554 = vcmp.ge.f32.partialorder %v1553, 0.0
          %v1555 = vsel %vm1554, 1, 0
          %v1556 = vcvt.s32.f32 %v1555
          %v1557 = vmul.f32 %v1510, %v1442
          %v1558 = vsub.f32 1.0, %v1510
          %v1559 = vmul.f32 %v1558, %v1556
          %v1560 = vadd.f32 %v1557, %v1559
          %v1561 = vstv %s1451
          %vm1562 = vcmp.eq.s32.totalorder %v1189, %v1561
          %v1563 = vsel %vm1562, 1, 0
          %1564 = vset.pattern.permute.xlu0 0
          %1565 = vperm.xlu0 %1564, %v1563
          %v1566 = vpop.permute.xlu0 %1565
          %vm1567 = vcmp.eq.s32.totalorder %v1566, 1
          %v1568 = vsel %vm1567, %v1560, %v1450
        $region117: #{tpu_custom_call.1} parent=92 // loop_footer
          %s1200 = sadd.s32 %s1198, 1
        $region118: #{tpu_custom_call.1} parent=92 // loop_footer_branch
          %1197 = sbr.rel target = $region114
        $region119: #{tpu_custom_call.1} parent=92 // loop_exit
          _
        %v1569 = vld [vmem:[%s7] sm:$0xff]
        %v1570 = vld [vmem:[%s7 + $0x8] sm:$0xff]
        %v1571 = vld [vmem:[%s7 + $0x10] sm:$0xff]
        %v1572 = vld [vmem:[%s7 + $0x18] sm:$0xff]
        %v1573 = vld [vmem:[%s7 + $0x20] sm:$0xff]
        %v1574 = vld [vmem:[%s7 + $0x28] sm:$0xff]
        %v1575 = vld [vmem:[%s7 + $0x30] sm:$0xff]
        %v1576 = vld [vmem:[%s7 + $0x38] sm:$0xff]
        %v1577 = vld [vmem:[%s7 + $0x40] sm:$0xff]
        %v1578 = vld [vmem:[%s7 + $0x48] sm:$0xff]
        %v1579 = vld [vmem:[%s7 + $0x50] sm:$0xff]
        %v1580 = vld [vmem:[%s7 + $0x58] sm:$0xff]
        %v1581 = vld [vmem:[%s7 + $0x60] sm:$0xff]
        %v1582 = vld [vmem:[%s7 + $0x68] sm:$0xff]
        %v1583 = vld [vmem:[%s7 + $0x70] sm:$0xff]
        %v1584 = vld [vmem:[%s7 + $0x78] sm:$0xff]
        %v1585 = vld [vmem:[%s8] sm:$0x1]
        %v1587 = vlaneseq
        %v1588 = vshrl.u32 %v1587, 7
        %v1589 = vsub.s32 0, %v1588
        %v1590 = vrot.slane %v1585, %v1589
        %1592 = vmatprep.subr.mxu0 0.0
        %1593 = vmatpush1.msra.mxu0 %v1569
        %1594 = vmatprep.subr.mxu0 0.0
        %1595 = vmatpush1.msra.mxu0 %v1570
        %1596 = vmatprep.subr.mxu0 0.0
        %1597 = vmatpush1.msra.mxu0 %v1571
        %1598 = vmatprep.subr.mxu0 0.0
        %1599 = vmatpush1.msra.mxu0 %v1572
        %1600 = vmatprep.subr.mxu0 0.0
        %1601 = vmatpush1.msra.mxu0 %v1573
        %1602 = vmatprep.subr.mxu0 0.0
        %1603 = vmatpush1.msra.mxu0 %v1574
        %1604 = vmatprep.subr.mxu0 0.0
        %1605 = vmatpush1.msra.mxu0 %v1575
        %1606 = vmatprep.subr.mxu0 0.0
        %1607 = vmatpush1.msra.mxu0 %v1576
        %1608 = vmatprep.subr.mxu0 0.0
        %1609 = vmatpush1.msra.mxu0 %v1577
        %1610 = vmatprep.subr.mxu0 0.0
        %1611 = vmatpush1.msra.mxu0 %v1578
        %1612 = vmatprep.subr.mxu0 0.0
        %1613 = vmatpush1.msra.mxu0 %v1579
        %1614 = vmatprep.subr.mxu0 0.0
        %1615 = vmatpush1.msra.mxu0 %v1580
        %1616 = vmatprep.subr.mxu0 0.0
        %1617 = vmatpush1.msra.mxu0 %v1581
        %1618 = vmatprep.subr.mxu0 0.0
        %1619 = vmatpush1.msra.mxu0 %v1582
        %1620 = vmatprep.subr.mxu0 0.0
        %1621 = vmatpush1.msra.mxu0 %v1583
        %1622 = vmatprep.subr.mxu0 0.0
        %1623 = vmatpush1.msra.mxu0 %v1584
        %1624 = vmatprep.subr.mxu0 0.0
        %1625 = vmatpush1.msra.mxu0 0.0
        %1626 = vmatprep.subr.mxu0 0.0
        %1627 = vmatpush1.msra.mxu0 0.0
        %1628 = vmatprep.subr.mxu0 0.0
        %1629 = vmatpush1.msra.mxu0 0.0
        %1630 = vmatprep.subr.mxu0 0.0
        %1631 = vmatpush1.msra.mxu0 0.0
        %1632 = vmatprep.subr.mxu0 0.0
        %1633 = vmatpush1.msra.mxu0 0.0
        %1634 = vmatprep.subr.mxu0 0.0
        %1635 = vmatpush1.msra.mxu0 0.0
        %1636 = vmatprep.subr.mxu0 0.0
        %1637 = vmatpush1.msra.mxu0 0.0
        %1638 = vmatprep.subr.mxu0 0.0
        %1639 = vmatpush1.msra.mxu0 0.0
        %1640 = vmatprep.subr.mxu0 0.0
        %1641 = vmatpush1.msra.mxu0 0.0
        %1642 = vmatprep.subr.mxu0 0.0
        %1643 = vmatpush1.msra.mxu0 0.0
        %1644 = vmatprep.subr.mxu0 0.0
        %1645 = vmatpush1.msra.mxu0 0.0
        %1646 = vmatprep.subr.mxu0 0.0
        %1647 = vmatpush1.msra.mxu0 0.0
        %1648 = vmatprep.subr.mxu0 0.0
        %1649 = vmatpush1.msra.mxu0 0.0
        %1650 = vmatprep.subr.mxu0 0.0
        %1651 = vmatpush1.msra.mxu0 0.0
        %1652 = vmatprep.subr.mxu0 0.0
        %1653 = vmatpush1.msra.mxu0 0.0
        %1654 = vmatprep.subr.mxu0 0.0
        %1655 = vmatpush1.msra.mxu0 0.0
        %1656 = vmatprep.mubr.f32.mxu0 0.0
        %1657 = vmatmul.mubr.f32.gmra.mrb[0].mxu0 %v1204
        %v1658 = vpop.f32.mrb[0].mxu0
        %v1659 = vadd.f32 %v1590, %v1658
        %v1660 = vpop.f32.mrb[0].mxu0
        %1661 = vdwg.mxu0
        %vm1662 = vcmask 261120
        %1663 = vst.msk [vmem:[%s449] sm:$0xff] %vm1662, %v1659
        %s1664 = sand.u32 %s239, 1
        %s1665 = scalar_lea.sflag [#allocation8], %s1664
        %s1666 = sand.u32 %s239, 1
        %s1667 = smul.addr %s1666, 8
        %s1668 = scalar_lea.vmem [#allocation11], %s1667
        // Predicated region
        $region120: #{tpu_custom_call.1} parent=92 // pred_check
          %p1669 = pneg %p249
        $region121: #{tpu_custom_call.1} parent=92 // pred_check_branch
          %1671 = sbr.rel (%p1669) target = $region123
        $region122: #{tpu_custom_call.1} parent=92 // pred_region
          %s1673 = ssub.s32 128, 128
          %1674 = vsyncadd %s1665, %s1673
          %s1675 = smul.addr %s32, 128
          %s1676 = scalar_lea.hbm %s10, %s1675
          %s1678 = sshll.u32 %s1668, 4
          %s1679 = int_to_ptr.vmem [resolvable:$true] %s1678
          %1681 = dma.vmem_to_hbm [thread:$0]  %s1679, 128, %s1676, %s1665
        $region123: #{tpu_custom_call.1} parent=92 // pred_fallthru
          _
      $region93: #{tpu_custom_call.1} parent=5 // pred_fallthru
        _
      %p1682 = scmp.le.s32.totalorder 2, %s27
      // Predicated region
      $region124: #{tpu_custom_call.1} parent=5 // pred_check
        %p1683 = pneg %p1682
      $region125: #{tpu_custom_call.1} parent=5 // pred_check_branch
        %1685 = sbr.rel (%p1683) target = $region127
      $region126: #{tpu_custom_call.1} parent=5 // pred_region
        %s1686 = ssub.s32 %s27, 2
        // Predicated region
        $region128: #{tpu_custom_call.1} parent=126 // pred_check
          %p1687 = pneg %p255
        $region129: #{tpu_custom_call.1} parent=126 // pred_check_branch
          %1689 = sbr.rel (%p1687) target = $region131
        $region130: #{tpu_custom_call.1} parent=126 // pred_region
          %s1690 = sand.u32 %s240, 1
          %s1691 = scalar_lea.sflag [#allocation8], %s1690
          %s1692 = sand.u32 %s240, 1
          %s1693 = smul.addr %s1692, 8
          %s1694 = scalar_lea.vmem [#allocation11], %s1693
          %1695 = dma.done %s1691, 128
        $region131: #{tpu_custom_call.1} parent=126 // pred_fallthru
          _
      $region127: #{tpu_custom_call.1} parent=5 // pred_fallthru
        _
    $region6: #{tpu_custom_call.1} parent=1 // loop_footer
      %s31 = sadd.s32 1, %s27
    $region7: #{tpu_custom_call.1} parent=1 // loop_footer_branch
      %26 = sbr.rel target = $region3
    $region8: #{tpu_custom_call.1} parent=1 // loop_exit
      _
    %1696 = vsyncpa [#allocation7], 1
    %s1697 = scalar_lea.sflag [#allocation7], 1
    %1698 = vsyncpa %s1697, 1
    %1699 = vsyncpa [#allocation10], 1
    %1700 = vsyncpa [#allocation8], 1
    %s1701 = scalar_lea.sflag [#allocation8], 1
    %1702 = vsyncpa %s1701, 1

</llo_original>
